<compile_context>
chip_gen: v5e
topology: v5e:2x2
jax: 0.10.0
libtpu: 0.0.40
codegen_flags: <defaults>
</compile_context>

<pallas_src>
import functools

import jax
import jax.numpy as jnp
from jax.experimental import pallas as pl
from jax.experimental.pallas import tpu as pltpu

HEADS = 8
OUT_CH = 8
NEG_SLOPE = 0.2  # PyG GATConv default LeakyReLU slope


# ---------------------------------------------------------------------------
# Fused Pallas kernel: conv1 -> ELU -> conv2 -> ELU -> conv3 -> ELU -> fc2
# ---------------------------------------------------------------------------
def _gatnet_kernel(x_ref, adjt_ref, tilemat_ref, lanetile_ref, mbd_ref, mask8_ref,
                   w1_ref, wd1_ref, ws1_ref, b1_ref,
                   w2_ref, wd2_ref, ws2_ref, b2_ref,
                   w3_ref, wd3_ref, ws3_ref, b3_ref,
                   fcw_ref, fcb_ref, o_ref, *, neg_slope):
    adjt = adjt_ref[...]          # [N, H*N]   adjt[i, h*N+j] = 1 iff edge j->i
    tilemat = tilemat_ref[...]    # [H*N, N]   tilemat[h*N+j, j'] = (j == j')
    lanetile = lanetile_ref[...]  # [N, H*N]   lanetile[j', h*N+j] = (j == j')
    mbd = mbd_ref[...]            # [H*N, HC]  mbd[h*N+j, h'*C+c] = (h == h')
    mask8 = mask8_ref[...]        # [H, H*N]   mask8[h', h*N+j] = (h == h')

    def gat(xw, wd_rep, ws_blkt, bias):
        # xw: [N, HC] projected features.
        # dst term (depends on target i = sublane row), already in e-layout:
        #   dst[i, h*N+j] = a_dst[h] . xw[i, head-h block]
        dst = jnp.dot(xw, wd_rep, preferred_element_type=jnp.float32)        # [N, H*N]
        # src term (depends on source j = lane): project to [N, H], then scatter
        # heads onto lane blocks with a tiny matmul + masked sublane reduction
        # (no transpose, no concatenate).
        s_nh = jnp.dot(xw, ws_blkt, preferred_element_type=jnp.float32)      # [N, H]
        s_cols = jnp.dot(s_nh, mask8, preferred_element_type=jnp.float32)    # [N, H*N]
        src = jnp.sum(lanetile * s_cols, axis=0, keepdims=True)              # [1, H*N]

        e = dst + src                                                         # [N, H*N]
        e = jnp.where(e > 0, e, neg_slope * e)         # LeakyReLU
        e = jnp.where(adjt > 0, e, -1e30)              # mask non-edges BEFORE the max
        # Global (all-heads) row max: the shift is constant within each head's
        # softmax group, so the softmax result is exact; a per-head max would
        # only matter for cross-head logit spreads > ~88 (f32 exp underflow).
        e = e - jnp.max(e, axis=1, keepdims=True)
        p = jnp.exp(e)                                 # masked entries -> exactly 0

        # Aggregation: fold the head mask into the operand (block-diagonal xw),
        # one lane-dense [N,H*N] @ [H*N,HC] matmul with full K=128 depth.
        xw_bd = mbd * jnp.dot(tilemat, xw, preferred_element_type=jnp.float32)  # [H*N, HC]
        num = jnp.dot(p, xw_bd, preferred_element_type=jnp.float32)             # [N, HC]
        den = jnp.dot(p, mbd, preferred_element_type=jnp.float32)               # [N, HC]
        out = num / den + bias                         # exact divide (1e-4 tolerance)
        return jnp.where(out > 0, out, jnp.exp(out) - 1.0)    # fused ELU (alpha=1.0)

    xw1 = x_ref[...] * w1_ref[...]                     # K=1 projection on the VPU
    h1 = gat(xw1, wd1_ref[...], ws1_ref[...], b1_ref[...])
    h2 = gat(jnp.dot(h1, w2_ref[...], preferred_element_type=jnp.float32),
             wd2_ref[...], ws2_ref[...], b2_ref[...])
    h3 = gat(jnp.dot(h2, w3_ref[...], preferred_element_type=jnp.float32),
             wd3_ref[...], ws3_ref[...], b3_ref[...])
    # Final Linear(64, 1).  The result is 16 floats; any layout needs a masked
    # store (<128 lanes), so the fused (N,1) store beats an extra XLA launch.
    o_ref[...] = (jnp.dot(h3, fcw_ref[...], preferred_element_type=jnp.float32)
                  + fcb_ref[...])


# ---------------------------------------------------------------------------
# One-time host-side preprocessing (cached outside the per-call jit)
# ---------------------------------------------------------------------------
def prepare_inputs(adj, params):
    n = adj.shape[0]
    h, c = HEADS, OUT_CH
    hc = h * c
    eye_h = jnp.eye(h, dtype=jnp.float32)
    eye_n = jnp.eye(n, dtype=jnp.float32)

    def blk(a):  # [H, C] attention vector -> block-diagonal [H, H*C]
        return (eye_h[:, :, None] * a[:, None, :]).reshape(h, hc)

    def layer(a_src, a_dst):
        ws_blkt = blk(a_src).T                         # [HC, H]
        wd_rep = jnp.repeat(blk(a_dst), n, axis=0).T   # [HC, H*N]
        return ws_blkt, wd_rep

    ws1, wd1 = layer(params["as1"], params["ad1"])
    ws2, wd2 = layer(params["as2"], params["ad2"])
    ws3, wd3 = layer(params["as3"], params["ad3"])

    row_head = jnp.arange(h * n)[:, None] // n
    col_head = jnp.arange(hc)[None, :] // c
    mbd = (row_head == col_head).astype(jnp.float32)                    # [H*N, HC]
    mask8 = (jnp.arange(h)[:, None]
             == (jnp.arange(h * n)[None, :] // n)).astype(jnp.float32)  # [H, H*N]
    lanetile = jnp.tile(eye_n, (1, h))                                  # [N, H*N]
    tilemat = jnp.tile(eye_n, (h, 1))                                   # [H*N, N]
    adjt = jnp.tile(adj, (1, h))                                        # [N, H*N]

    return dict(adjt=adjt, tilemat=tilemat, lanetile=lanetile, mbd=mbd, mask8=mask8,
                w1=params["w1"], wd1=wd1, ws1=ws1, b1=params["b1"],
                w2=params["w2"], wd2=wd2, ws2=ws2, b2=params["b2"],
                w3=params["w3"], wd3=wd3, ws3=ws3, b3=params["b3"],
                fcw=params["fcw"], fcb=params["fcb"])


@jax.jit
def gatnet_forward(x, prep):
    n = x.shape[0]
    kernel = functools.partial(_gatnet_kernel, neg_slope=NEG_SLOPE)
    args = (x, prep["adjt"], prep["tilemat"], prep["lanetile"], prep["mbd"], prep["mask8"],
            prep["w1"], prep["wd1"], prep["ws1"], prep["b1"],
            prep["w2"], prep["wd2"], prep["ws2"], prep["b2"],
            prep["w3"], prep["wd3"], prep["ws3"], prep["b3"],
            prep["fcw"], prep["fcb"])
    return pl.pallas_call(
        kernel,
        out_shape=jax.ShapeDtypeStruct((n, 1), jnp.float32),
        in_specs=[pl.BlockSpec(memory_space=pltpu.MemorySpace.VMEM)] * len(args),
        out_specs=pl.BlockSpec(memory_space=pltpu.MemorySpace.VMEM),
    )(*args)
    # TODO(synk): for batched graphs / large N, add a ("parallel",) grid axis over
    # graphs (also unlocks v7x's 2nd TensorCore) and tile the dense adjacency via
    # BlockSpec with pltpu.CompilerParams(vmem_limit_bytes=...) per chip generation.


# ---------------------------------------------------------------------------
# Pure-JAX reference (for correctness check only)
# ---------------------------------------------------------------------------
def _gat_ref(x, w, asrc, adst, bias, adj):
    h, c = asrc.shape
    xw = x @ w
    xw_h = xw.reshape(-1, h, c)
    s_src = jnp.einsum("nhc,hc->nh", xw_h, asrc)
    s_dst = jnp.einsum("nhc,hc->nh", xw_h, adst)
    e = s_dst[:, None, :] + s_src[None, :, :]              # [N, N, H]
    e = jnp.where(e > 0, e, NEG_SLOPE * e)
    e = jnp.where(adj[:, :, None] > 0, e, -1e30)
    e = e - e.max(axis=1, keepdims=True)
    p = jnp.exp(e) * adj[:, :, None]
    alpha = p / p.sum(axis=1, keepdims=True)
    out = jnp.einsum("ijh,jhc->ihc", alpha, xw_h).reshape(-1, h * c) + bias
    return jnp.where(out > 0, out, jnp.exp(out) - 1.0)


def gatnet_ref(x, adj, params):
    h = _gat_ref(x, params["w1"], params["as1"], params["ad1"], params["b1"], adj)
    h = _gat_ref(h, params["w2"], params["as2"], params["ad2"], params["b2"], adj)
    h = _gat_ref(h, params["w3"], params["as3"], params["ad3"], params["b3"], adj)
    return h @ params["fcw"] + params["fcb"]


# ---------------------------------------------------------------------------
# Main
# ---------------------------------------------------------------------------
def _glorot(key, shape):
    fan_in, fan_out = shape[0], shape[-1]
    s = (2.0 / (fan_in + fan_out)) ** 0.5
    return s * jax.random.normal(key, shape, jnp.float32)


if __name__ == "__main__":
    N = 16          # number of graph nodes
    E = 40          # number of directed edges
    F_IN = 1        # GatNet.conv1 has in_channels = 1

    key = jax.random.PRNGKey(0)
    ks = jax.random.split(key, 16)

    # node features (data.x) and edge_index (2, E) -> dense adjacency
    x = jax.random.normal(ks[0], (N, F_IN), jnp.float32)
    src = jax.random.randint(ks[1], (E,), 0, N)
    dst = jax.random.randint(ks[2], (E,), 0, N)
    adj = jnp.zeros((N, N), jnp.float32).at[dst, src].set(1.0)
    adj = jnp.maximum(adj, jnp.eye(N, dtype=jnp.float32))     # add self-loops

    HC = HEADS * OUT_CH  # 64
    params = {
        "w1": _glorot(ks[3], (F_IN, HC)),
        "as1": _glorot(ks[4], (HEADS, OUT_CH)),
        "ad1": _glorot(ks[5], (HEADS, OUT_CH)),
        "b1": jnp.zeros((1, HC), jnp.float32),
        "w2": _glorot(ks[6], (HC, HC)),
        "as2": _glorot(ks[7], (HEADS, OUT_CH)),
        "ad2": _glorot(ks[8], (HEADS, OUT_CH)),
        "b2": jnp.zeros((1, HC), jnp.float32),
        "w3": _glorot(ks[9], (HC, HC)),
        "as3": _glorot(ks[10], (HEADS, OUT_CH)),
        "ad3": _glorot(ks[11], (HEADS, OUT_CH)),
        "b3": jnp.zeros((1, HC), jnp.float32),
        "fcw": _glorot(ks[12], (HC, 1)),
        "fcb": jnp.zeros((1, 1), jnp.float32),
    }

    prep = prepare_inputs(adj, params)          # one-time, outside the per-call jit
    out = gatnet_forward(x, prep)
    out = jax.block_until_ready(out)

    assert out.shape == (N, 1), out.shape
    ref = gatnet_ref(x, adj, params)
    assert bool(jnp.allclose(out, ref, rtol=1e-4, atol=1e-4)), "mismatch vs reference"

    print("KERNEL_OK")
</pallas_src>

<mosaic_0001>
module attributes {stable_mosaic.version = 11 : i64} {
  func.func @_gatnet_kernel(%arg0: memref<16x1xf32, #tpu.memory_space<vmem>>, %arg1: memref<16x128xf32, #tpu.memory_space<vmem>>, %arg2: memref<128x16xf32, #tpu.memory_space<vmem>>, %arg3: memref<16x128xf32, #tpu.memory_space<vmem>>, %arg4: memref<128x64xf32, #tpu.memory_space<vmem>>, %arg5: memref<8x128xf32, #tpu.memory_space<vmem>>, %arg6: memref<1x64xf32, #tpu.memory_space<vmem>>, %arg7: memref<64x128xf32, #tpu.memory_space<vmem>>, %arg8: memref<64x8xf32, #tpu.memory_space<vmem>>, %arg9: memref<1x64xf32, #tpu.memory_space<vmem>>, %arg10: memref<64x64xf32, #tpu.memory_space<vmem>>, %arg11: memref<64x128xf32, #tpu.memory_space<vmem>>, %arg12: memref<64x8xf32, #tpu.memory_space<vmem>>, %arg13: memref<1x64xf32, #tpu.memory_space<vmem>>, %arg14: memref<64x64xf32, #tpu.memory_space<vmem>>, %arg15: memref<64x128xf32, #tpu.memory_space<vmem>>, %arg16: memref<64x8xf32, #tpu.memory_space<vmem>>, %arg17: memref<1x64xf32, #tpu.memory_space<vmem>>, %arg18: memref<64x1xf32, #tpu.memory_space<vmem>>, %arg19: memref<1x1xf32, #tpu.memory_space<vmem>>, %arg20: memref<16x1xf32, #tpu.memory_space<vmem>>) attributes {dimension_semantics = [], scalar_prefetch = 0 : i64, scratch_operands = 0 : i64, tpu.core_type = #tpu.core_type<tc>} {
    %c0 = arith.constant 0 : index
    %c0_0 = arith.constant 0 : index
    %0 = vector.load %arg1[%c0, %c0_0] : memref<16x128xf32, #tpu.memory_space<vmem>>, vector<16x128xf32>
    %c0_1 = arith.constant 0 : index
    %c0_2 = arith.constant 0 : index
    %1 = vector.load %arg2[%c0_1, %c0_2] : memref<128x16xf32, #tpu.memory_space<vmem>>, vector<128x16xf32>
    %c0_3 = arith.constant 0 : index
    %c0_4 = arith.constant 0 : index
    %2 = vector.load %arg3[%c0_3, %c0_4] : memref<16x128xf32, #tpu.memory_space<vmem>>, vector<16x128xf32>
    %c0_5 = arith.constant 0 : index
    %c0_6 = arith.constant 0 : index
    %3 = vector.load %arg4[%c0_5, %c0_6] : memref<128x64xf32, #tpu.memory_space<vmem>>, vector<128x64xf32>
    %c0_7 = arith.constant 0 : index
    %c0_8 = arith.constant 0 : index
    %4 = vector.load %arg5[%c0_7, %c0_8] : memref<8x128xf32, #tpu.memory_space<vmem>>, vector<8x128xf32>
    %c0_9 = arith.constant 0 : index
    %c0_10 = arith.constant 0 : index
    %5 = vector.load %arg0[%c0_9, %c0_10] : memref<16x1xf32, #tpu.memory_space<vmem>>, vector<16x1xf32>
    %c0_11 = arith.constant 0 : index
    %c0_12 = arith.constant 0 : index
    %6 = vector.load %arg6[%c0_11, %c0_12] : memref<1x64xf32, #tpu.memory_space<vmem>>, vector<1x64xf32>
    %7 = vector.broadcast %5 : vector<16x1xf32> to vector<16x64xf32>
    %8 = vector.broadcast %6 : vector<1x64xf32> to vector<16x64xf32>
    %9 = arith.mulf %7, %8 : vector<16x64xf32>
    %c0_13 = arith.constant 0 : index
    %c0_14 = arith.constant 0 : index
    %10 = vector.load %arg7[%c0_13, %c0_14] : memref<64x128xf32, #tpu.memory_space<vmem>>, vector<64x128xf32>
    %c0_15 = arith.constant 0 : index
    %c0_16 = arith.constant 0 : index
    %11 = vector.load %arg8[%c0_15, %c0_16] : memref<64x8xf32, #tpu.memory_space<vmem>>, vector<64x8xf32>
    %c0_17 = arith.constant 0 : index
    %c0_18 = arith.constant 0 : index
    %12 = vector.load %arg9[%c0_17, %c0_18] : memref<1x64xf32, #tpu.memory_space<vmem>>, vector<1x64xf32>
    %cst = arith.constant dense<0.000000e+00> : vector<16x128xf32>
    %13 = tpu.matmul %9, %10, %cst {dimension_numbers = #tpu.dot_dimension_numbers<[1], [0], [0], [1], [0, 0, 1, 1], [], []>} : vector<16x64xf32>, vector<64x128xf32>, vector<16x128xf32> -> vector<16x128xf32>
    %cst_19 = arith.constant dense<0.000000e+00> : vector<16x8xf32>
    %14 = tpu.matmul %9, %11, %cst_19 {dimension_numbers = #tpu.dot_dimension_numbers<[1], [0], [0], [1], [0, 0, 1, 1], [], []>} : vector<16x64xf32>, vector<64x8xf32>, vector<16x8xf32> -> vector<16x8xf32>
    %cst_20 = arith.constant dense<0.000000e+00> : vector<16x128xf32>
    %15 = tpu.matmul %14, %4, %cst_20 {dimension_numbers = #tpu.dot_dimension_numbers<[1], [0], [0], [1], [0, 0, 1, 1], [], []>} : vector<16x8xf32>, vector<8x128xf32>, vector<16x128xf32> -> vector<16x128xf32>
    %16 = arith.mulf %2, %15 : vector<16x128xf32>
    %cst_21 = arith.constant dense<0.000000e+00> : vector<128xf32>
    %17 = vector.multi_reduction <add>, %16, %cst_21 [0] : vector<16x128xf32> to vector<128xf32>
    %18 = vector.shape_cast %17 : vector<128xf32> to vector<1x128xf32>
    %19 = vector.broadcast %18 : vector<1x128xf32> to vector<16x128xf32>
    %20 = arith.addf %13, %19 : vector<16x128xf32>
    %cst_22 = arith.constant 0.000000e+00 : f32
    %21 = vector.broadcast %cst_22 : f32 to vector<16x128xf32>
    %22 = arith.cmpf ogt, %20, %21 : vector<16x128xf32>
    %cst_23 = arith.constant 2.000000e-01 : f32
    %23 = vector.broadcast %cst_23 : f32 to vector<16x128xf32>
    %24 = arith.mulf %23, %20 : vector<16x128xf32>
    %25 = arith.select %22, %20, %24 : vector<16x128xi1>, vector<16x128xf32>
    %cst_24 = arith.constant 0.000000e+00 : f32
    %26 = vector.broadcast %cst_24 : f32 to vector<16x128xf32>
    %27 = arith.cmpf ogt, %0, %26 : vector<16x128xf32>
    %cst_25 = arith.constant -1.000000e+30 : f32
    %28 = vector.broadcast %cst_25 : f32 to vector<16x128xf32>
    %29 = arith.select %27, %25, %28 : vector<16x128xi1>, vector<16x128xf32>
    %cst_26 = arith.constant dense<0xFF800000> : vector<16xf32>
    %30 = vector.multi_reduction <maximumf>, %29, %cst_26 [1] : vector<16x128xf32> to vector<16xf32>
    %31 = vector.shape_cast %30 : vector<16xf32> to vector<16x1xf32>
    %32 = vector.broadcast %31 : vector<16x1xf32> to vector<16x128xf32>
    %33 = arith.subf %29, %32 : vector<16x128xf32>
    %34 = math.exp %33 : vector<16x128xf32>
    %cst_27 = arith.constant dense<0.000000e+00> : vector<128x64xf32>
    %35 = tpu.matmul %1, %9, %cst_27 {dimension_numbers = #tpu.dot_dimension_numbers<[1], [0], [0], [1], [0, 0, 1, 1], [], []>} : vector<128x16xf32>, vector<16x64xf32>, vector<128x64xf32> -> vector<128x64xf32>
    %36 = arith.mulf %3, %35 : vector<128x64xf32>
    %cst_28 = arith.constant dense<0.000000e+00> : vector<16x64xf32>
    %37 = tpu.matmul %34, %36, %cst_28 {dimension_numbers = #tpu.dot_dimension_numbers<[1], [0], [0], [1], [0, 0, 1, 1], [], []>} : vector<16x128xf32>, vector<128x64xf32>, vector<16x64xf32> -> vector<16x64xf32>
    %cst_29 = arith.constant dense<0.000000e+00> : vector<16x64xf32>
    %38 = tpu.matmul %34, %3, %cst_29 {dimension_numbers = #tpu.dot_dimension_numbers<[1], [0], [0], [1], [0, 0, 1, 1], [], []>} : vector<16x128xf32>, vector<128x64xf32>, vector<16x64xf32> -> vector<16x64xf32>
    %39 = arith.divf %37, %38 : vector<16x64xf32>
    %40 = vector.broadcast %12 : vector<1x64xf32> to vector<16x64xf32>
    %41 = arith.addf %39, %40 : vector<16x64xf32>
    %cst_30 = arith.constant 0.000000e+00 : f32
    %42 = vector.broadcast %cst_30 : f32 to vector<16x64xf32>
    %43 = arith.cmpf ogt, %41, %42 : vector<16x64xf32>
    %44 = math.exp %41 : vector<16x64xf32>
    %cst_31 = arith.constant 1.000000e+00 : f32
    %45 = vector.broadcast %cst_31 : f32 to vector<16x64xf32>
    %46 = arith.subf %44, %45 : vector<16x64xf32>
    %47 = arith.select %43, %41, %46 : vector<16x64xi1>, vector<16x64xf32>
    %c0_32 = arith.constant 0 : index
    %c0_33 = arith.constant 0 : index
    %48 = vector.load %arg10[%c0_32, %c0_33] : memref<64x64xf32, #tpu.memory_space<vmem>>, vector<64x64xf32>
    %cst_34 = arith.constant dense<0.000000e+00> : vector<16x64xf32>
    %49 = tpu.matmul %47, %48, %cst_34 {dimension_numbers = #tpu.dot_dimension_numbers<[1], [0], [0], [1], [0, 0, 1, 1], [], []>} : vector<16x64xf32>, vector<64x64xf32>, vector<16x64xf32> -> vector<16x64xf32>
    %c0_35 = arith.constant 0 : index
    %c0_36 = arith.constant 0 : index
    %50 = vector.load %arg11[%c0_35, %c0_36] : memref<64x128xf32, #tpu.memory_space<vmem>>, vector<64x128xf32>
    %c0_37 = arith.constant 0 : index
    %c0_38 = arith.constant 0 : index
    %51 = vector.load %arg12[%c0_37, %c0_38] : memref<64x8xf32, #tpu.memory_space<vmem>>, vector<64x8xf32>
    %c0_39 = arith.constant 0 : index
    %c0_40 = arith.constant 0 : index
    %52 = vector.load %arg13[%c0_39, %c0_40] : memref<1x64xf32, #tpu.memory_space<vmem>>, vector<1x64xf32>
    %cst_41 = arith.constant dense<0.000000e+00> : vector<16x128xf32>
    %53 = tpu.matmul %49, %50, %cst_41 {dimension_numbers = #tpu.dot_dimension_numbers<[1], [0], [0], [1], [0, 0, 1, 1], [], []>} : vector<16x64xf32>, vector<64x128xf32>, vector<16x128xf32> -> vector<16x128xf32>
    %cst_42 = arith.constant dense<0.000000e+00> : vector<16x8xf32>
    %54 = tpu.matmul %49, %51, %cst_42 {dimension_numbers = #tpu.dot_dimension_numbers<[1], [0], [0], [1], [0, 0, 1, 1], [], []>} : vector<16x64xf32>, vector<64x8xf32>, vector<16x8xf32> -> vector<16x8xf32>
    %cst_43 = arith.constant dense<0.000000e+00> : vector<16x128xf32>
    %55 = tpu.matmul %54, %4, %cst_43 {dimension_numbers = #tpu.dot_dimension_numbers<[1], [0], [0], [1], [0, 0, 1, 1], [], []>} : vector<16x8xf32>, vector<8x128xf32>, vector<16x128xf32> -> vector<16x128xf32>
    %56 = arith.mulf %2, %55 : vector<16x128xf32>
    %cst_44 = arith.constant dense<0.000000e+00> : vector<128xf32>
    %57 = vector.multi_reduction <add>, %56, %cst_44 [0] : vector<16x128xf32> to vector<128xf32>
    %58 = vector.shape_cast %57 : vector<128xf32> to vector<1x128xf32>
    %59 = vector.broadcast %58 : vector<1x128xf32> to vector<16x128xf32>
    %60 = arith.addf %53, %59 : vector<16x128xf32>
    %cst_45 = arith.constant 0.000000e+00 : f32
    %61 = vector.broadcast %cst_45 : f32 to vector<16x128xf32>
    %62 = arith.cmpf ogt, %60, %61 : vector<16x128xf32>
    %cst_46 = arith.constant 2.000000e-01 : f32
    %63 = vector.broadcast %cst_46 : f32 to vector<16x128xf32>
    %64 = arith.mulf %63, %60 : vector<16x128xf32>
    %65 = arith.select %62, %60, %64 : vector<16x128xi1>, vector<16x128xf32>
    %cst_47 = arith.constant 0.000000e+00 : f32
    %66 = vector.broadcast %cst_47 : f32 to vector<16x128xf32>
    %67 = arith.cmpf ogt, %0, %66 : vector<16x128xf32>
    %cst_48 = arith.constant -1.000000e+30 : f32
    %68 = vector.broadcast %cst_48 : f32 to vector<16x128xf32>
    %69 = arith.select %67, %65, %68 : vector<16x128xi1>, vector<16x128xf32>
    %cst_49 = arith.constant dense<0xFF800000> : vector<16xf32>
    %70 = vector.multi_reduction <maximumf>, %69, %cst_49 [1] : vector<16x128xf32> to vector<16xf32>
    %71 = vector.shape_cast %70 : vector<16xf32> to vector<16x1xf32>
    %72 = vector.broadcast %71 : vector<16x1xf32> to vector<16x128xf32>
    %73 = arith.subf %69, %72 : vector<16x128xf32>
    %74 = math.exp %73 : vector<16x128xf32>
    %cst_50 = arith.constant dense<0.000000e+00> : vector<128x64xf32>
    %75 = tpu.matmul %1, %49, %cst_50 {dimension_numbers = #tpu.dot_dimension_numbers<[1], [0], [0], [1], [0, 0, 1, 1], [], []>} : vector<128x16xf32>, vector<16x64xf32>, vector<128x64xf32> -> vector<128x64xf32>
    %76 = arith.mulf %3, %75 : vector<128x64xf32>
    %cst_51 = arith.constant dense<0.000000e+00> : vector<16x64xf32>
    %77 = tpu.matmul %74, %76, %cst_51 {dimension_numbers = #tpu.dot_dimension_numbers<[1], [0], [0], [1], [0, 0, 1, 1], [], []>} : vector<16x128xf32>, vector<128x64xf32>, vector<16x64xf32> -> vector<16x64xf32>
    %cst_52 = arith.constant dense<0.000000e+00> : vector<16x64xf32>
    %78 = tpu.matmul %74, %3, %cst_52 {dimension_numbers = #tpu.dot_dimension_numbers<[1], [0], [0], [1], [0, 0, 1, 1], [], []>} : vector<16x128xf32>, vector<128x64xf32>, vector<16x64xf32> -> vector<16x64xf32>
    %79 = arith.divf %77, %78 : vector<16x64xf32>
    %80 = vector.broadcast %52 : vector<1x64xf32> to vector<16x64xf32>
    %81 = arith.addf %79, %80 : vector<16x64xf32>
    %cst_53 = arith.constant 0.000000e+00 : f32
    %82 = vector.broadcast %cst_53 : f32 to vector<16x64xf32>
    %83 = arith.cmpf ogt, %81, %82 : vector<16x64xf32>
    %84 = math.exp %81 : vector<16x64xf32>
    %cst_54 = arith.constant 1.000000e+00 : f32
    %85 = vector.broadcast %cst_54 : f32 to vector<16x64xf32>
    %86 = arith.subf %84, %85 : vector<16x64xf32>
    %87 = arith.select %83, %81, %86 : vector<16x64xi1>, vector<16x64xf32>
    %c0_55 = arith.constant 0 : index
    %c0_56 = arith.constant 0 : index
    %88 = vector.load %arg14[%c0_55, %c0_56] : memref<64x64xf32, #tpu.memory_space<vmem>>, vector<64x64xf32>
    %cst_57 = arith.constant dense<0.000000e+00> : vector<16x64xf32>
    %89 = tpu.matmul %87, %88, %cst_57 {dimension_numbers = #tpu.dot_dimension_numbers<[1], [0], [0], [1], [0, 0, 1, 1], [], []>} : vector<16x64xf32>, vector<64x64xf32>, vector<16x64xf32> -> vector<16x64xf32>
    %c0_58 = arith.constant 0 : index
    %c0_59 = arith.constant 0 : index
    %90 = vector.load %arg15[%c0_58, %c0_59] : memref<64x128xf32, #tpu.memory_space<vmem>>, vector<64x128xf32>
    %c0_60 = arith.constant 0 : index
    %c0_61 = arith.constant 0 : index
    %91 = vector.load %arg16[%c0_60, %c0_61] : memref<64x8xf32, #tpu.memory_space<vmem>>, vector<64x8xf32>
    %c0_62 = arith.constant 0 : index
    %c0_63 = arith.constant 0 : index
    %92 = vector.load %arg17[%c0_62, %c0_63] : memref<1x64xf32, #tpu.memory_space<vmem>>, vector<1x64xf32>
    %cst_64 = arith.constant dense<0.000000e+00> : vector<16x128xf32>
    %93 = tpu.matmul %89, %90, %cst_64 {dimension_numbers = #tpu.dot_dimension_numbers<[1], [0], [0], [1], [0, 0, 1, 1], [], []>} : vector<16x64xf32>, vector<64x128xf32>, vector<16x128xf32> -> vector<16x128xf32>
    %cst_65 = arith.constant dense<0.000000e+00> : vector<16x8xf32>
    %94 = tpu.matmul %89, %91, %cst_65 {dimension_numbers = #tpu.dot_dimension_numbers<[1], [0], [0], [1], [0, 0, 1, 1], [], []>} : vector<16x64xf32>, vector<64x8xf32>, vector<16x8xf32> -> vector<16x8xf32>
    %cst_66 = arith.constant dense<0.000000e+00> : vector<16x128xf32>
    %95 = tpu.matmul %94, %4, %cst_66 {dimension_numbers = #tpu.dot_dimension_numbers<[1], [0], [0], [1], [0, 0, 1, 1], [], []>} : vector<16x8xf32>, vector<8x128xf32>, vector<16x128xf32> -> vector<16x128xf32>
    %96 = arith.mulf %2, %95 : vector<16x128xf32>
    %cst_67 = arith.constant dense<0.000000e+00> : vector<128xf32>
    %97 = vector.multi_reduction <add>, %96, %cst_67 [0] : vector<16x128xf32> to vector<128xf32>
    %98 = vector.shape_cast %97 : vector<128xf32> to vector<1x128xf32>
    %99 = vector.broadcast %98 : vector<1x128xf32> to vector<16x128xf32>
    %100 = arith.addf %93, %99 : vector<16x128xf32>
    %cst_68 = arith.constant 0.000000e+00 : f32
    %101 = vector.broadcast %cst_68 : f32 to vector<16x128xf32>
    %102 = arith.cmpf ogt, %100, %101 : vector<16x128xf32>
    %cst_69 = arith.constant 2.000000e-01 : f32
    %103 = vector.broadcast %cst_69 : f32 to vector<16x128xf32>
    %104 = arith.mulf %103, %100 : vector<16x128xf32>
    %105 = arith.select %102, %100, %104 : vector<16x128xi1>, vector<16x128xf32>
    %cst_70 = arith.constant 0.000000e+00 : f32
    %106 = vector.broadcast %cst_70 : f32 to vector<16x128xf32>
    %107 = arith.cmpf ogt, %0, %106 : vector<16x128xf32>
    %cst_71 = arith.constant -1.000000e+30 : f32
    %108 = vector.broadcast %cst_71 : f32 to vector<16x128xf32>
    %109 = arith.select %107, %105, %108 : vector<16x128xi1>, vector<16x128xf32>
    %cst_72 = arith.constant dense<0xFF800000> : vector<16xf32>
    %110 = vector.multi_reduction <maximumf>, %109, %cst_72 [1] : vector<16x128xf32> to vector<16xf32>
    %111 = vector.shape_cast %110 : vector<16xf32> to vector<16x1xf32>
    %112 = vector.broadcast %111 : vector<16x1xf32> to vector<16x128xf32>
    %113 = arith.subf %109, %112 : vector<16x128xf32>
    %114 = math.exp %113 : vector<16x128xf32>
    %cst_73 = arith.constant dense<0.000000e+00> : vector<128x64xf32>
    %115 = tpu.matmul %1, %89, %cst_73 {dimension_numbers = #tpu.dot_dimension_numbers<[1], [0], [0], [1], [0, 0, 1, 1], [], []>} : vector<128x16xf32>, vector<16x64xf32>, vector<128x64xf32> -> vector<128x64xf32>
    %116 = arith.mulf %3, %115 : vector<128x64xf32>
    %cst_74 = arith.constant dense<0.000000e+00> : vector<16x64xf32>
    %117 = tpu.matmul %114, %116, %cst_74 {dimension_numbers = #tpu.dot_dimension_numbers<[1], [0], [0], [1], [0, 0, 1, 1], [], []>} : vector<16x128xf32>, vector<128x64xf32>, vector<16x64xf32> -> vector<16x64xf32>
    %cst_75 = arith.constant dense<0.000000e+00> : vector<16x64xf32>
    %118 = tpu.matmul %114, %3, %cst_75 {dimension_numbers = #tpu.dot_dimension_numbers<[1], [0], [0], [1], [0, 0, 1, 1], [], []>} : vector<16x128xf32>, vector<128x64xf32>, vector<16x64xf32> -> vector<16x64xf32>
    %119 = arith.divf %117, %118 : vector<16x64xf32>
    %120 = vector.broadcast %92 : vector<1x64xf32> to vector<16x64xf32>
    %121 = arith.addf %119, %120 : vector<16x64xf32>
    %cst_76 = arith.constant 0.000000e+00 : f32
    %122 = vector.broadcast %cst_76 : f32 to vector<16x64xf32>
    %123 = arith.cmpf ogt, %121, %122 : vector<16x64xf32>
    %124 = math.exp %121 : vector<16x64xf32>
    %cst_77 = arith.constant 1.000000e+00 : f32
    %125 = vector.broadcast %cst_77 : f32 to vector<16x64xf32>
    %126 = arith.subf %124, %125 : vector<16x64xf32>
    %127 = arith.select %123, %121, %126 : vector<16x64xi1>, vector<16x64xf32>
    %c0_78 = arith.constant 0 : index
    %c0_79 = arith.constant 0 : index
    %128 = vector.load %arg18[%c0_78, %c0_79] : memref<64x1xf32, #tpu.memory_space<vmem>>, vector<64x1xf32>
    %cst_80 = arith.constant dense<0.000000e+00> : vector<16x1xf32>
    %129 = tpu.matmul %127, %128, %cst_80 {dimension_numbers = #tpu.dot_dimension_numbers<[1], [0], [0], [1], [0, 0, 1, 1], [], []>} : vector<16x64xf32>, vector<64x1xf32>, vector<16x1xf32> -> vector<16x1xf32>
    %c0_81 = arith.constant 0 : index
    %c0_82 = arith.constant 0 : index
    %130 = vector.load %arg19[%c0_81, %c0_82] : memref<1x1xf32, #tpu.memory_space<vmem>>, vector<1x1xf32>
    %131 = vector.broadcast %130 : vector<1x1xf32> to vector<16x1xf32>
    %132 = arith.addf %129, %131 : vector<16x1xf32>
    %c0_83 = arith.constant 0 : index
    %c0_84 = arith.constant 0 : index
    %133 = vector.load %arg20[%c0_83, %c0_84] : memref<16x1xf32, #tpu.memory_space<vmem>>, vector<16x1xf32>
    tpu.vector_store %arg20[%c0_83, %c0_84], %132 {strides = array<i32>} : memref<16x1xf32, #tpu.memory_space<vmem>>, vector<16x1xf32>,
    return
  }
}

</mosaic_0001>

<llo_original>
// kernel: gatnet_forward.1
$region0: #{gatnet_forward.1}
  #allocation0 [shape = 'u32[]', space=smem, size = 0x4, offset = 0x4, fixed_abs, tag = 'smem constant byte address 0x4 - core index']
  #allocation1 [shape = 'u32[72,128]{1,0:T(1,128)}', space=vmem, size = 0x9000, scoped, tag = 'internal scratch']
  #allocation2 [shape = 'f32[1,1]{1,0:T(1,128)S(1)}', space=vmem, size = 0x200, scoped, tag = 'scoped memory for gatnet_forward.1']
  %s0 = inlined_call_operand.vmem [shape: f32[16,1], index: 0, kind: input, shape index: {}]
  %s1 = inlined_call_operand.vmem [shape: f32[16,128], index: 1, kind: input, shape index: {}]
  %s2 = inlined_call_operand.vmem [shape: f32[128,16], index: 2, kind: input, shape index: {}]
  %s3 = inlined_call_operand.vmem [shape: f32[16,128], index: 3, kind: input, shape index: {}]
  %s4 = inlined_call_operand.vmem [shape: f32[128,64], index: 4, kind: input, shape index: {}]
  %s5 = inlined_call_operand.vmem [shape: f32[8,128], index: 5, kind: input, shape index: {}]
  %s6 = inlined_call_operand.vmem [shape: f32[1,64], index: 6, kind: input, shape index: {}]
  %s7 = inlined_call_operand.vmem [shape: f32[64,128], index: 7, kind: input, shape index: {}]
  %s8 = inlined_call_operand.vmem [shape: f32[64,8], index: 8, kind: input, shape index: {}]
  %s9 = inlined_call_operand.vmem [shape: f32[1,64], index: 9, kind: input, shape index: {}]
  %s10 = inlined_call_operand.vmem [shape: f32[64,64], index: 10, kind: input, shape index: {}]
  %s11 = inlined_call_operand.vmem [shape: f32[64,128], index: 11, kind: input, shape index: {}]
  %s12 = inlined_call_operand.vmem [shape: f32[64,8], index: 12, kind: input, shape index: {}]
  %s13 = inlined_call_operand.vmem [shape: f32[1,64], index: 13, kind: input, shape index: {}]
  %s14 = inlined_call_operand.vmem [shape: f32[64,64], index: 14, kind: input, shape index: {}]
  %s15 = inlined_call_operand.vmem [shape: f32[64,128], index: 15, kind: input, shape index: {}]
  %s16 = inlined_call_operand.vmem [shape: f32[64,8], index: 16, kind: input, shape index: {}]
  %s17 = inlined_call_operand.vmem [shape: f32[1,64], index: 17, kind: input, shape index: {}]
  %s18 = inlined_call_operand.vmem [shape: f32[64,1], index: 18, kind: input, shape index: {}]
  %s19 = inlined_call_operand.<no memory space> [shape: f32[1,1], index: 19, kind: input, shape index: {}]
  %s20 = inlined_call_operand.vmem [shape: f32[16,1], index: 20, kind: output, shape index: {}]
  %s21 = sld [smem:[#allocation0]]
  $region90: #{gatnet_forward.1} parent=0
    _
  %s23 = ssub.s32 1, %s21
  %s24 = scalar_select 0, %s23, %s21
  %v25 = vstv %s19
  %26 = vst [vmem:[#allocation2] sm:$0x1] %v25
  // Predicated region
  $region2: #{gatnet_forward.1} parent=0 // pred_check
    _
  $region3: #{gatnet_forward.1} parent=0 // pred_check_branch
    %28 = sbr.rel (0) target = $region5
  $region4: #{gatnet_forward.1} parent=0 // pred_region
    _
  $region5: #{gatnet_forward.1} parent=0 // pred_fallthru
    _
  // Predicated region
  $region6: #{gatnet_forward.1} parent=0 // pred_check
    _
  $region7: #{gatnet_forward.1} parent=0 // pred_check_branch
    %30 = sbr.rel (0) target = $region9
  $region8: #{gatnet_forward.1} parent=0 // pred_region
    _
  $region9: #{gatnet_forward.1} parent=0 // pred_fallthru
    _
  // Predicated region
  $region10: #{gatnet_forward.1} parent=0 // pred_check
    _
  $region11: #{gatnet_forward.1} parent=0 // pred_check_branch
    %32 = sbr.rel (0) target = $region13
  $region12: #{gatnet_forward.1} parent=0 // pred_region
    _
  $region13: #{gatnet_forward.1} parent=0 // pred_fallthru
    _
  // Predicated region
  $region14: #{gatnet_forward.1} parent=0 // pred_check
    _
  $region15: #{gatnet_forward.1} parent=0 // pred_check_branch
    %34 = sbr.rel (0) target = $region17
  $region16: #{gatnet_forward.1} parent=0 // pred_region
    _
  $region17: #{gatnet_forward.1} parent=0 // pred_fallthru
    _
  // Predicated region
  $region18: #{gatnet_forward.1} parent=0 // pred_check
    _
  $region19: #{gatnet_forward.1} parent=0 // pred_check_branch
    %36 = sbr.rel (0) target = $region21
  $region20: #{gatnet_forward.1} parent=0 // pred_region
    _
  $region21: #{gatnet_forward.1} parent=0 // pred_fallthru
    _
  // Predicated region
  $region22: #{gatnet_forward.1} parent=0 // pred_check
    _
  $region23: #{gatnet_forward.1} parent=0 // pred_check_branch
    %38 = sbr.rel (0) target = $region25
  $region24: #{gatnet_forward.1} parent=0 // pred_region
    _
  $region25: #{gatnet_forward.1} parent=0 // pred_fallthru
    _
  // Predicated region
  $region26: #{gatnet_forward.1} parent=0 // pred_check
    _
  $region27: #{gatnet_forward.1} parent=0 // pred_check_branch
    %40 = sbr.rel (0) target = $region29
  $region28: #{gatnet_forward.1} parent=0 // pred_region
    _
  $region29: #{gatnet_forward.1} parent=0 // pred_fallthru
    _
  // Predicated region
  $region30: #{gatnet_forward.1} parent=0 // pred_check
    _
  $region31: #{gatnet_forward.1} parent=0 // pred_check_branch
    %42 = sbr.rel (0) target = $region33
  $region32: #{gatnet_forward.1} parent=0 // pred_region
    _
  $region33: #{gatnet_forward.1} parent=0 // pred_fallthru
    _
  // Predicated region
  $region34: #{gatnet_forward.1} parent=0 // pred_check
    _
  $region35: #{gatnet_forward.1} parent=0 // pred_check_branch
    %44 = sbr.rel (0) target = $region37
  $region36: #{gatnet_forward.1} parent=0 // pred_region
    _
  $region37: #{gatnet_forward.1} parent=0 // pred_fallthru
    _
  // Predicated region
  $region38: #{gatnet_forward.1} parent=0 // pred_check
    _
  $region39: #{gatnet_forward.1} parent=0 // pred_check_branch
    %46 = sbr.rel (0) target = $region41
  $region40: #{gatnet_forward.1} parent=0 // pred_region
    _
  $region41: #{gatnet_forward.1} parent=0 // pred_fallthru
    _
  // Predicated region
  $region42: #{gatnet_forward.1} parent=0 // pred_check
    _
  $region43: #{gatnet_forward.1} parent=0 // pred_check_branch
    %48 = sbr.rel (0) target = $region45
  $region44: #{gatnet_forward.1} parent=0 // pred_region
    _
  $region45: #{gatnet_forward.1} parent=0 // pred_fallthru
    _
  // Predicated region
  $region46: #{gatnet_forward.1} parent=0 // pred_check
    _
  $region47: #{gatnet_forward.1} parent=0 // pred_check_branch
    %50 = sbr.rel (0) target = $region49
  $region48: #{gatnet_forward.1} parent=0 // pred_region
    _
  $region49: #{gatnet_forward.1} parent=0 // pred_fallthru
    _
  // Predicated region
  $region50: #{gatnet_forward.1} parent=0 // pred_check
    _
  $region51: #{gatnet_forward.1} parent=0 // pred_check_branch
    %52 = sbr.rel (0) target = $region53
  $region52: #{gatnet_forward.1} parent=0 // pred_region
    _
  $region53: #{gatnet_forward.1} parent=0 // pred_fallthru
    _
  // Predicated region
  $region54: #{gatnet_forward.1} parent=0 // pred_check
    _
  $region55: #{gatnet_forward.1} parent=0 // pred_check_branch
    %54 = sbr.rel (0) target = $region57
  $region56: #{gatnet_forward.1} parent=0 // pred_region
    _
  $region57: #{gatnet_forward.1} parent=0 // pred_fallthru
    _
  // Predicated region
  $region58: #{gatnet_forward.1} parent=0 // pred_check
    _
  $region59: #{gatnet_forward.1} parent=0 // pred_check_branch
    %56 = sbr.rel (0) target = $region61
  $region60: #{gatnet_forward.1} parent=0 // pred_region
    _
  $region61: #{gatnet_forward.1} parent=0 // pred_fallthru
    _
  // Predicated region
  $region62: #{gatnet_forward.1} parent=0 // pred_check
    _
  $region63: #{gatnet_forward.1} parent=0 // pred_check_branch
    %58 = sbr.rel (0) target = $region65
  $region64: #{gatnet_forward.1} parent=0 // pred_region
    _
  $region65: #{gatnet_forward.1} parent=0 // pred_fallthru
    _
  // Predicated region
  $region66: #{gatnet_forward.1} parent=0 // pred_check
    _
  $region67: #{gatnet_forward.1} parent=0 // pred_check_branch
    %60 = sbr.rel (0) target = $region69
  $region68: #{gatnet_forward.1} parent=0 // pred_region
    _
  $region69: #{gatnet_forward.1} parent=0 // pred_fallthru
    _
  // Predicated region
  $region70: #{gatnet_forward.1} parent=0 // pred_check
    _
  $region71: #{gatnet_forward.1} parent=0 // pred_check_branch
    %62 = sbr.rel (0) target = $region73
  $region72: #{gatnet_forward.1} parent=0 // pred_region
    _
  $region73: #{gatnet_forward.1} parent=0 // pred_fallthru
    _
  // Predicated region
  $region74: #{gatnet_forward.1} parent=0 // pred_check
    _
  $region75: #{gatnet_forward.1} parent=0 // pred_check_branch
    %64 = sbr.rel (0) target = $region77
  $region76: #{gatnet_forward.1} parent=0 // pred_region
    _
  $region77: #{gatnet_forward.1} parent=0 // pred_fallthru
    _
  // Predicated region
  $region78: #{gatnet_forward.1} parent=0 // pred_check
    _
  $region79: #{gatnet_forward.1} parent=0 // pred_check_branch
    %66 = sbr.rel (0) target = $region81
  $region80: #{gatnet_forward.1} parent=0 // pred_region
    _
  $region81: #{gatnet_forward.1} parent=0 // pred_fallthru
    _
  %v67 = vld [vmem:[%s1] sm:$0xff]
  %v68 = vld [vmem:[%s1 + $0x8] sm:$0xff]
  %v69 = vld [vmem:[%s2] sm:$0xff]
  %v70 = vld [vmem:[%s2 + $0x8] sm:$0xff]
  %v71 = vld [vmem:[%s2 + $0x10] sm:$0xff]
  %v72 = vld [vmem:[%s2 + $0x18] sm:$0xff]
  %v73 = vld [vmem:[%s2 + $0x20] sm:$0xff]
  %v74 = vld [vmem:[%s2 + $0x28] sm:$0xff]
  %v75 = vld [vmem:[%s2 + $0x30] sm:$0xff]
  %v76 = vld [vmem:[%s2 + $0x38] sm:$0xff]
  %v77 = vld [vmem:[%s2 + $0x40] sm:$0xff]
  %v78 = vld [vmem:[%s2 + $0x48] sm:$0xff]
  %v79 = vld [vmem:[%s2 + $0x50] sm:$0xff]
  %v80 = vld [vmem:[%s2 + $0x58] sm:$0xff]
  %v81 = vld [vmem:[%s2 + $0x60] sm:$0xff]
  %v82 = vld [vmem:[%s2 + $0x68] sm:$0xff]
  %v83 = vld [vmem:[%s2 + $0x70] sm:$0xff]
  %v84 = vld [vmem:[%s2 + $0x78] sm:$0xff]
  %v85 = vld [vmem:[%s3] sm:$0xff]
  %v86 = vld [vmem:[%s3 + $0x8] sm:$0xff]
  %v87 = vld [vmem:[%s4] sm:$0xff]
  %v88 = vld [vmem:[%s4 + $0x8] sm:$0xff]
  %v89 = vld [vmem:[%s4 + $0x10] sm:$0xff]
  %v90 = vld [vmem:[%s4 + $0x18] sm:$0xff]
  %v91 = vld [vmem:[%s4 + $0x20] sm:$0xff]
  %v92 = vld [vmem:[%s4 + $0x28] sm:$0xff]
  %v93 = vld [vmem:[%s4 + $0x30] sm:$0xff]
  %v94 = vld [vmem:[%s4 + $0x38] sm:$0xff]
  %v95 = vld [vmem:[%s4 + $0x40] sm:$0xff]
  %v96 = vld [vmem:[%s4 + $0x48] sm:$0xff]
  %v97 = vld [vmem:[%s4 + $0x50] sm:$0xff]
  %v98 = vld [vmem:[%s4 + $0x58] sm:$0xff]
  %v99 = vld [vmem:[%s4 + $0x60] sm:$0xff]
  %v100 = vld [vmem:[%s4 + $0x68] sm:$0xff]
  %v101 = vld [vmem:[%s4 + $0x70] sm:$0xff]
  %v102 = vld [vmem:[%s4 + $0x78] sm:$0xff]
  %v103 = vld [vmem:[%s5] sm:$0xff]
  %v104 = vld [vmem:[%s0] sm:$0xff]
  %v105 = vld [vmem:[%s0 + $0x8] sm:$0xff]
  %v106 = vld [vmem:[%s6] sm:$0x1]
  %108 = vset.pattern.permute.xlu0 0
  %109 = vperm.xlu0 %108, %v104
  %v110 = vpop.permute.xlu0 %109
  %113 = vset.pattern.permute.xlu0 0
  %114 = vperm.xlu0 %113, %v105
  %v115 = vpop.permute.xlu0 %114
  %v118 = vperm.slane %v106, 0
  %v120 = vmul.f32 %v110, %v118
  %v121 = vmul.f32 %v115, %v118
  %v122 = vld [vmem:[%s7] sm:$0xff]
  %v123 = vld [vmem:[%s7 + $0x8] sm:$0xff]
  %v124 = vld [vmem:[%s7 + $0x10] sm:$0xff]
  %v125 = vld [vmem:[%s7 + $0x18] sm:$0xff]
  %v126 = vld [vmem:[%s7 + $0x20] sm:$0xff]
  %v127 = vld [vmem:[%s7 + $0x28] sm:$0xff]
  %v128 = vld [vmem:[%s7 + $0x30] sm:$0xff]
  %v129 = vld [vmem:[%s7 + $0x38] sm:$0xff]
  %v130 = vld [vmem:[%s8] sm:$0xff]
  %v131 = vld [vmem:[%s8 + $0x8] sm:$0xff]
  %v132 = vld [vmem:[%s8 + $0x10] sm:$0xff]
  %v133 = vld [vmem:[%s8 + $0x18] sm:$0xff]
  %v134 = vld [vmem:[%s8 + $0x20] sm:$0xff]
  %v135 = vld [vmem:[%s8 + $0x28] sm:$0xff]
  %v136 = vld [vmem:[%s8 + $0x30] sm:$0xff]
  %v137 = vld [vmem:[%s8 + $0x38] sm:$0xff]
  %v138 = vld [vmem:[%s9] sm:$0x1]
  %vm139 = vcmask 523264
  %v141 = vsel %vm139, %v120, 0
  %v144 = vsel %vm139, %v121, 0
  %146 = vmatpush.msra.mxu0 0.0
  %147 = vmatpush.msra.mxu0 0.0
  %148 = vmatpush.msra.mxu0 0.0
  %149 = vmatpush.msra.mxu0 0.0
  %150 = vmatpush.msra.mxu0 0.0
  %151 = vmatpush.msra.mxu0 0.0
  %152 = vmatpush.msra.mxu0 0.0
  %153 = vmatpush.msra.mxu0 0.0
  %154 = vmatpush.msra.mxu0 %v137
  %155 = vmatpush.msra.mxu0 %v136
  %156 = vmatpush.msra.mxu0 %v135
  %157 = vmatpush.msra.mxu0 %v134
  %158 = vmatpush.msra.mxu0 %v133
  %159 = vmatpush.msra.mxu0 %v132
  %160 = vmatpush.msra.mxu0 %v131
  %161 = vmatpush.msra.mxu0 %v130
  %162 = vmatmul.f32.gmra.mxu0 %v141
  %v163 = vpop.f32.mrf.mxu0
  %v164 = vadd.f32 0.0, %v163
  %165 = vmatmul.f32.gmra.mxu0 %v144
  %v166 = vpop.f32.mrf.mxu0
  %v167 = vadd.f32 0.0, %v166
  %168 = vdwg.mxu0
  %vm169 = vcmask 64512
  %v171 = vsel %vm169, %v164, 0
  %v174 = vsel %vm169, %v167, 0
  %176 = vmatpush.msra.mxu0 0.0
  %177 = vmatpush.msra.mxu0 0.0
  %178 = vmatpush.msra.mxu0 0.0
  %179 = vmatpush.msra.mxu0 0.0
  %180 = vmatpush.msra.mxu0 0.0
  %181 = vmatpush.msra.mxu0 0.0
  %182 = vmatpush.msra.mxu0 0.0
  %183 = vmatpush.msra.mxu0 0.0
  %184 = vmatpush.msra.mxu0 0.0
  %185 = vmatpush.msra.mxu0 0.0
  %186 = vmatpush.msra.mxu0 0.0
  %187 = vmatpush.msra.mxu0 0.0
  %188 = vmatpush.msra.mxu0 0.0
  %189 = vmatpush.msra.mxu0 0.0
  %190 = vmatpush.msra.mxu0 0.0
  %191 = vmatpush.msra.mxu0 %v103
  %192 = vmatmul.f32.gmra.mxu0 %v171
  %v193 = vpop.f32.mrf.mxu0
  %v194 = vadd.f32 0.0, %v193
  %195 = vmatmul.f32.gmra.mxu0 %v174
  %v196 = vpop.f32.mrf.mxu0
  %v197 = vadd.f32 0.0, %v196
  %198 = vdwg.mxu0
  %v199 = vmul.f32 %v85, %v194
  %v200 = vmul.f32 %v86, %v197
  %v201 = vadd.f32 %v199, %v200
  %v202 = vrot.slane %v201, 4
  %v203 = vadd.f32 %v201, %v202
  %v204 = vrot.slane %v203, 2
  %v205 = vadd.f32 %v203, %v204
  %v206 = vrot.slane %v205, 1
  %v207 = vadd.f32 %v205, %v206
  %208 = vmatpush.msra.mxu0 0.0
  %209 = vmatpush.msra.mxu0 0.0
  %210 = vmatpush.msra.mxu0 0.0
  %211 = vmatpush.msra.mxu0 0.0
  %212 = vmatpush.msra.mxu0 0.0
  %213 = vmatpush.msra.mxu0 0.0
  %214 = vmatpush.msra.mxu0 0.0
  %215 = vmatpush.msra.mxu0 0.0
  %216 = vmatpush.msra.mxu0 %v129
  %217 = vmatpush.msra.mxu0 %v128
  %218 = vmatpush.msra.mxu0 %v127
  %219 = vmatpush.msra.mxu0 %v126
  %220 = vmatpush.msra.mxu0 %v125
  %221 = vmatpush.msra.mxu0 %v124
  %222 = vmatpush.msra.mxu0 %v123
  %223 = vmatpush.msra.mxu0 %v122
  %224 = vmatmul.f32.gmra.mxu0 %v141
  %v225 = vpop.f32.mrf.mxu0
  %v226 = vadd.f32 %v207, %v225
  %227 = vmatmul.f32.gmra.mxu0 %v144
  %v228 = vpop.f32.mrf.mxu0
  %v229 = vadd.f32 %v207, %v228
  %230 = vdwg.mxu0
  %vm231 = vcmp.gt.f32.partialorder %v226, 0.0
  %vm232 = vcmp.gt.f32.partialorder %v229, 0.0
  %v233 = vmul.f32 %v226, 0.2
  %v234 = vmul.f32 %v229, 0.2
  %v235 = vsel %vm231, %v226, %v233
  %v236 = vsel %vm232, %v229, %v234
  %vm237 = vcmp.gt.f32.partialorder %v67, 0.0
  %vm238 = vcmp.gt.f32.partialorder %v68, 0.0
  %v239 = vsel %vm237, %v235, -1e+30
  %v240 = vsel %vm238, %v236, -1e+30
  %241 = vmax.xlane.f32.xlu0 %v239
  %v242 = vpop.xlane.xlu0 %241
  %243 = vmax.xlane.f32.xlu0 %v240
  %v244 = vpop.xlane.xlu0 %243
  %v245 = vsub.f32 %v239, %v242
  %v246 = vsub.f32 %v240, %v244
  %v247 = vmul.f32 %v245, 1.442695
  %v248 = vpow.pop %v247
  %v249 = vmul.f32 %v246, 1.442695
  %v250 = vpow.pop %v249
  %vm251 = vcmask 130048
  %v253 = vsel %vm251, %v69, 0
  %v256 = vsel %vm251, %v70, 0
  %v259 = vsel %vm251, %v71, 0
  %v262 = vsel %vm251, %v72, 0
  %v265 = vsel %vm251, %v73, 0
  %v268 = vsel %vm251, %v74, 0
  %v271 = vsel %vm251, %v75, 0
  %v274 = vsel %vm251, %v76, 0
  %v277 = vsel %vm251, %v77, 0
  %v280 = vsel %vm251, %v78, 0
  %v283 = vsel %vm251, %v79, 0
  %v286 = vsel %vm251, %v80, 0
  %v289 = vsel %vm251, %v81, 0
  %v292 = vsel %vm251, %v82, 0
  %v295 = vsel %vm251, %v83, 0
  %v298 = vsel %vm251, %v84, 0
  %300 = vmatpush.msra.mxu0 0.0
  %301 = vmatpush.msra.mxu0 0.0
  %302 = vmatpush.msra.mxu0 0.0
  %303 = vmatpush.msra.mxu0 0.0
  %304 = vmatpush.msra.mxu0 0.0
  %305 = vmatpush.msra.mxu0 0.0
  %306 = vmatpush.msra.mxu0 0.0
  %307 = vmatpush.msra.mxu0 0.0
  %308 = vmatpush.msra.mxu0 0.0
  %309 = vmatpush.msra.mxu0 0.0
  %310 = vmatpush.msra.mxu0 0.0
  %311 = vmatpush.msra.mxu0 0.0
  %312 = vmatpush.msra.mxu0 0.0
  %313 = vmatpush.msra.mxu0 0.0
  %314 = vmatpush.msra.mxu0 %v121
  %315 = vmatpush.msra.mxu0 %v120
  %316 = vmatmul.f32.gmra.mxu0 %v253
  %v317 = vpop.f32.mrf.mxu0
  %v318 = vadd.f32 0.0, %v317
  %319 = vmatmul.f32.gmra.mxu0 %v256
  %v320 = vpop.f32.mrf.mxu0
  %v321 = vadd.f32 0.0, %v320
  %322 = vmatmul.f32.gmra.mxu0 %v259
  %v323 = vpop.f32.mrf.mxu0
  %v324 = vadd.f32 0.0, %v323
  %325 = vmatmul.f32.gmra.mxu0 %v262
  %v326 = vpop.f32.mrf.mxu0
  %v327 = vadd.f32 0.0, %v326
  %328 = vmatmul.f32.gmra.mxu0 %v265
  %v329 = vpop.f32.mrf.mxu0
  %v330 = vadd.f32 0.0, %v329
  %331 = vmatmul.f32.gmra.mxu0 %v268
  %v332 = vpop.f32.mrf.mxu0
  %v333 = vadd.f32 0.0, %v332
  %334 = vmatmul.f32.gmra.mxu0 %v271
  %v335 = vpop.f32.mrf.mxu0
  %v336 = vadd.f32 0.0, %v335
  %337 = vmatmul.f32.gmra.mxu0 %v274
  %v338 = vpop.f32.mrf.mxu0
  %v339 = vadd.f32 0.0, %v338
  %340 = vmatmul.f32.gmra.mxu0 %v277
  %v341 = vpop.f32.mrf.mxu0
  %v342 = vadd.f32 0.0, %v341
  %343 = vmatmul.f32.gmra.mxu0 %v280
  %v344 = vpop.f32.mrf.mxu0
  %v345 = vadd.f32 0.0, %v344
  %346 = vmatmul.f32.gmra.mxu0 %v283
  %v347 = vpop.f32.mrf.mxu0
  %v348 = vadd.f32 0.0, %v347
  %349 = vmatmul.f32.gmra.mxu0 %v286
  %v350 = vpop.f32.mrf.mxu0
  %v351 = vadd.f32 0.0, %v350
  %352 = vmatmul.f32.gmra.mxu0 %v289
  %v353 = vpop.f32.mrf.mxu0
  %v354 = vadd.f32 0.0, %v353
  %355 = vmatmul.f32.gmra.mxu0 %v292
  %v356 = vpop.f32.mrf.mxu0
  %v357 = vadd.f32 0.0, %v356
  %358 = vmatmul.f32.gmra.mxu0 %v295
  %v359 = vpop.f32.mrf.mxu0
  %v360 = vadd.f32 0.0, %v359
  %361 = vmatmul.f32.gmra.mxu0 %v298
  %v362 = vpop.f32.mrf.mxu0
  %v363 = vadd.f32 0.0, %v362
  %364 = vdwg.mxu0
  %v365 = vmul.f32 %v87, %v318
  %v366 = vmul.f32 %v88, %v321
  %v367 = vmul.f32 %v89, %v324
  %v368 = vmul.f32 %v90, %v327
  %v369 = vmul.f32 %v91, %v330
  %v370 = vmul.f32 %v92, %v333
  %v371 = vmul.f32 %v93, %v336
  %v372 = vmul.f32 %v94, %v339
  %v373 = vmul.f32 %v95, %v342
  %v374 = vmul.f32 %v96, %v345
  %v375 = vmul.f32 %v97, %v348
  %v376 = vmul.f32 %v98, %v351
  %v377 = vmul.f32 %v99, %v354
  %v378 = vmul.f32 %v100, %v357
  %v379 = vmul.f32 %v101, %v360
  %v380 = vmul.f32 %v102, %v363
  %381 = vmatpush.msra.mxu0 %v380
  %382 = vmatpush.msra.mxu0 %v379
  %383 = vmatpush.msra.mxu0 %v378
  %384 = vmatpush.msra.mxu0 %v377
  %385 = vmatpush.msra.mxu0 %v376
  %386 = vmatpush.msra.mxu0 %v375
  %387 = vmatpush.msra.mxu0 %v374
  %388 = vmatpush.msra.mxu0 %v373
  %389 = vmatpush.msra.mxu0 %v372
  %390 = vmatpush.msra.mxu0 %v371
  %391 = vmatpush.msra.mxu0 %v370
  %392 = vmatpush.msra.mxu0 %v369
  %393 = vmatpush.msra.mxu0 %v368
  %394 = vmatpush.msra.mxu0 %v367
  %395 = vmatpush.msra.mxu0 %v366
  %396 = vmatpush.msra.mxu0 %v365
  %397 = vmatmul.f32.gmra.mxu0 %v248
  %v398 = vpop.f32.mrf.mxu0
  %v399 = vadd.f32 0.0, %v398
  %400 = vmatmul.f32.gmra.mxu0 %v250
  %v401 = vpop.f32.mrf.mxu0
  %v402 = vadd.f32 0.0, %v401
  %403 = vdwg.mxu0
  %404 = vmatpush.msra.mxu0 %v102
  %405 = vmatpush.msra.mxu0 %v101
  %406 = vmatpush.msra.mxu0 %v100
  %407 = vmatpush.msra.mxu0 %v99
  %408 = vmatpush.msra.mxu0 %v98
  %409 = vmatpush.msra.mxu0 %v97
  %410 = vmatpush.msra.mxu0 %v96
  %411 = vmatpush.msra.mxu0 %v95
  %412 = vmatpush.msra.mxu0 %v94
  %413 = vmatpush.msra.mxu0 %v93
  %414 = vmatpush.msra.mxu0 %v92
  %415 = vmatpush.msra.mxu0 %v91
  %416 = vmatpush.msra.mxu0 %v90
  %417 = vmatpush.msra.mxu0 %v89
  %418 = vmatpush.msra.mxu0 %v88
  %419 = vmatpush.msra.mxu0 %v87
  %420 = vmatmul.f32.gmra.mxu0 %v248
  %v421 = vpop.f32.mrf.mxu0
  %v422 = vadd.f32 0.0, %v421
  %423 = vmatmul.f32.gmra.mxu0 %v250
  %v424 = vpop.f32.mrf.mxu0
  %v425 = vadd.f32 0.0, %v424
  %426 = vdwg.mxu0
  %v427 = vrcp.pop %v422
  %v428 = vmul.f32 %v422, %v427
  %v429 = vsub.f32 1.0, %v428
  %v430 = vmul.f32 %v427, %v429
  %v431 = vadd.f32 %v427, %v430
  %vm432 = vweird.f32 %v422
  %vm433 = vweird.f32 %v427
  %vm434 = vmor %vm432, %vm433
  %v435 = vsel %vm434, %v427, %v431
  %v436 = vand.u32 2147483647, %v422
  %vm437 = vcmp.eq.f32.partialorder %v436, 8.507059e+37
  %v438 = vand.u32 %v422, 2147483648
  %v439 = vor.u32 1.1754944e-38, %v438
  %v440 = vsel %vm437, %v439, %v435
  %v441 = vmul.f32 %v399, %v440
  %v442 = vrcp.pop %v425
  %v443 = vmul.f32 %v425, %v442
  %v444 = vsub.f32 1.0, %v443
  %v445 = vmul.f32 %v442, %v444
  %v446 = vadd.f32 %v442, %v445
  %vm447 = vweird.f32 %v425
  %vm448 = vweird.f32 %v442
  %vm449 = vmor %vm447, %vm448
  %v450 = vsel %vm449, %v442, %v446
  %v451 = vand.u32 2147483647, %v425
  %vm452 = vcmp.eq.f32.partialorder %v451, 8.507059e+37
  %v453 = vand.u32 %v425, 2147483648
  %v454 = vor.u32 1.1754944e-38, %v453
  %v455 = vsel %vm452, %v454, %v450
  %v456 = vmul.f32 %v402, %v455
  %v458 = vperm.slane %v138, 0
  %v460 = vadd.f32 %v441, %v458
  %v461 = vadd.f32 %v456, %v458
  %vm462 = vcmp.gt.f32.partialorder %v460, 0.0
  %vm463 = vcmp.gt.f32.partialorder %v461, 0.0
  %v464 = vmul.f32 %v460, 1.442695
  %v465 = vpow.pop %v464
  %v466 = vmul.f32 %v461, 1.442695
  %v467 = vpow.pop %v466
  %v468 = vsub.f32 %v465, 1.0
  %v469 = vsub.f32 %v467, 1.0
  %v470 = vsel %vm462, %v460, %v468
  %v471 = vsel %vm463, %v461, %v469
  %v472 = vld [vmem:[%s10] sm:$0xff]
  %v473 = vld [vmem:[%s10 + $0x8] sm:$0xff]
  %v474 = vld [vmem:[%s10 + $0x10] sm:$0xff]
  %v475 = vld [vmem:[%s10 + $0x18] sm:$0xff]
  %v476 = vld [vmem:[%s10 + $0x20] sm:$0xff]
  %v477 = vld [vmem:[%s10 + $0x28] sm:$0xff]
  %v478 = vld [vmem:[%s10 + $0x30] sm:$0xff]
  %v479 = vld [vmem:[%s10 + $0x38] sm:$0xff]
  %v481 = vsel %vm139, %v470, 0
  %v484 = vsel %vm139, %v471, 0
  %486 = vmatpush.msra.mxu0 0.0
  %487 = vmatpush.msra.mxu0 0.0
  %488 = vmatpush.msra.mxu0 0.0
  %489 = vmatpush.msra.mxu0 0.0
  %490 = vmatpush.msra.mxu0 0.0
  %491 = vmatpush.msra.mxu0 0.0
  %492 = vmatpush.msra.mxu0 0.0
  %493 = vmatpush.msra.mxu0 0.0
  %494 = vmatpush.msra.mxu0 %v479
  %495 = vmatpush.msra.mxu0 %v478
  %496 = vmatpush.msra.mxu0 %v477
  %497 = vmatpush.msra.mxu0 %v476
  %498 = vmatpush.msra.mxu0 %v475
  %499 = vmatpush.msra.mxu0 %v474
  %500 = vmatpush.msra.mxu0 %v473
  %501 = vmatpush.msra.mxu0 %v472
  %502 = vmatmul.f32.gmra.mxu0 %v481
  %v503 = vpop.f32.mrf.mxu0
  %v504 = vadd.f32 0.0, %v503
  %505 = vmatmul.f32.gmra.mxu0 %v484
  %v506 = vpop.f32.mrf.mxu0
  %v507 = vadd.f32 0.0, %v506
  %508 = vdwg.mxu0
  %v509 = vld [vmem:[%s11] sm:$0xff]
  %v510 = vld [vmem:[%s11 + $0x8] sm:$0xff]
  %v511 = vld [vmem:[%s11 + $0x10] sm:$0xff]
  %v512 = vld [vmem:[%s11 + $0x18] sm:$0xff]
  %v513 = vld [vmem:[%s11 + $0x20] sm:$0xff]
  %v514 = vld [vmem:[%s11 + $0x28] sm:$0xff]
  %v515 = vld [vmem:[%s11 + $0x30] sm:$0xff]
  %v516 = vld [vmem:[%s11 + $0x38] sm:$0xff]
  %v517 = vld [vmem:[%s12] sm:$0xff]
  %v518 = vld [vmem:[%s12 + $0x8] sm:$0xff]
  %v519 = vld [vmem:[%s12 + $0x10] sm:$0xff]
  %v520 = vld [vmem:[%s12 + $0x18] sm:$0xff]
  %v521 = vld [vmem:[%s12 + $0x20] sm:$0xff]
  %v522 = vld [vmem:[%s12 + $0x28] sm:$0xff]
  %v523 = vld [vmem:[%s12 + $0x30] sm:$0xff]
  %v524 = vld [vmem:[%s12 + $0x38] sm:$0xff]
  %v525 = vld [vmem:[%s13] sm:$0x1]
  %v527 = vsel %vm139, %v504, 0
  %v530 = vsel %vm139, %v507, 0
  %532 = vmatpush.msra.mxu0 0.0
  %533 = vmatpush.msra.mxu0 0.0
  %534 = vmatpush.msra.mxu0 0.0
  %535 = vmatpush.msra.mxu0 0.0
  %536 = vmatpush.msra.mxu0 0.0
  %537 = vmatpush.msra.mxu0 0.0
  %538 = vmatpush.msra.mxu0 0.0
  %539 = vmatpush.msra.mxu0 0.0
  %540 = vmatpush.msra.mxu0 %v524
  %541 = vmatpush.msra.mxu0 %v523
  %542 = vmatpush.msra.mxu0 %v522
  %543 = vmatpush.msra.mxu0 %v521
  %544 = vmatpush.msra.mxu0 %v520
  %545 = vmatpush.msra.mxu0 %v519
  %546 = vmatpush.msra.mxu0 %v518
  %547 = vmatpush.msra.mxu0 %v517
  %548 = vmatmul.f32.gmra.mxu0 %v527
  %v549 = vpop.f32.mrf.mxu0
  %v550 = vadd.f32 0.0, %v549
  %551 = vmatmul.f32.gmra.mxu0 %v530
  %v552 = vpop.f32.mrf.mxu0
  %v553 = vadd.f32 0.0, %v552
  %554 = vdwg.mxu0
  %v556 = vsel %vm169, %v550, 0
  %v559 = vsel %vm169, %v553, 0
  %561 = vmatpush.msra.mxu0 0.0
  %562 = vmatpush.msra.mxu0 0.0
  %563 = vmatpush.msra.mxu0 0.0
  %564 = vmatpush.msra.mxu0 0.0
  %565 = vmatpush.msra.mxu0 0.0
  %566 = vmatpush.msra.mxu0 0.0
  %567 = vmatpush.msra.mxu0 0.0
  %568 = vmatpush.msra.mxu0 0.0
  %569 = vmatpush.msra.mxu0 0.0
  %570 = vmatpush.msra.mxu0 0.0
  %571 = vmatpush.msra.mxu0 0.0
  %572 = vmatpush.msra.mxu0 0.0
  %573 = vmatpush.msra.mxu0 0.0
  %574 = vmatpush.msra.mxu0 0.0
  %575 = vmatpush.msra.mxu0 0.0
  %576 = vmatpush.msra.mxu0 %v103
  %577 = vmatmul.f32.gmra.mxu0 %v556
  %v578 = vpop.f32.mrf.mxu0
  %v579 = vadd.f32 0.0, %v578
  %580 = vmatmul.f32.gmra.mxu0 %v559
  %v581 = vpop.f32.mrf.mxu0
  %v582 = vadd.f32 0.0, %v581
  %583 = vdwg.mxu0
  %v584 = vmul.f32 %v85, %v579
  %v585 = vmul.f32 %v86, %v582
  %v586 = vadd.f32 %v584, %v585
  %v587 = vrot.slane %v586, 4
  %v588 = vadd.f32 %v586, %v587
  %v589 = vrot.slane %v588, 2
  %v590 = vadd.f32 %v588, %v589
  %v591 = vrot.slane %v590, 1
  %v592 = vadd.f32 %v590, %v591
  %593 = vmatpush.msra.mxu0 0.0
  %594 = vmatpush.msra.mxu0 0.0
  %595 = vmatpush.msra.mxu0 0.0
  %596 = vmatpush.msra.mxu0 0.0
  %597 = vmatpush.msra.mxu0 0.0
  %598 = vmatpush.msra.mxu0 0.0
  %599 = vmatpush.msra.mxu0 0.0
  %600 = vmatpush.msra.mxu0 0.0
  %601 = vmatpush.msra.mxu0 %v516
  %602 = vmatpush.msra.mxu0 %v515
  %603 = vmatpush.msra.mxu0 %v514
  %604 = vmatpush.msra.mxu0 %v513
  %605 = vmatpush.msra.mxu0 %v512
  %606 = vmatpush.msra.mxu0 %v511
  %607 = vmatpush.msra.mxu0 %v510
  %608 = vmatpush.msra.mxu0 %v509
  %609 = vmatmul.f32.gmra.mxu0 %v527
  %v610 = vpop.f32.mrf.mxu0
  %v611 = vadd.f32 %v592, %v610
  %612 = vmatmul.f32.gmra.mxu0 %v530
  %v613 = vpop.f32.mrf.mxu0
  %v614 = vadd.f32 %v592, %v613
  %615 = vdwg.mxu0
  %vm616 = vcmp.gt.f32.partialorder %v611, 0.0
  %vm617 = vcmp.gt.f32.partialorder %v614, 0.0
  %v618 = vmul.f32 %v611, 0.2
  %v619 = vmul.f32 %v614, 0.2
  %v620 = vsel %vm616, %v611, %v618
  %v621 = vsel %vm617, %v614, %v619
  %v622 = vsel %vm237, %v620, -1e+30
  %v623 = vsel %vm238, %v621, -1e+30
  %624 = vmax.xlane.f32.xlu0 %v622
  %v625 = vpop.xlane.xlu0 %624
  %626 = vmax.xlane.f32.xlu0 %v623
  %v627 = vpop.xlane.xlu0 %626
  %v628 = vsub.f32 %v622, %v625
  %v629 = vsub.f32 %v623, %v627
  %v630 = vmul.f32 %v628, 1.442695
  %v631 = vpow.pop %v630
  %v632 = vmul.f32 %v629, 1.442695
  %v633 = vpow.pop %v632
  %634 = vmatpush.msra.mxu0 0.0
  %635 = vmatpush.msra.mxu0 0.0
  %636 = vmatpush.msra.mxu0 0.0
  %637 = vmatpush.msra.mxu0 0.0
  %638 = vmatpush.msra.mxu0 0.0
  %639 = vmatpush.msra.mxu0 0.0
  %640 = vmatpush.msra.mxu0 0.0
  %641 = vmatpush.msra.mxu0 0.0
  %642 = vmatpush.msra.mxu0 0.0
  %643 = vmatpush.msra.mxu0 0.0
  %644 = vmatpush.msra.mxu0 0.0
  %645 = vmatpush.msra.mxu0 0.0
  %646 = vmatpush.msra.mxu0 0.0
  %647 = vmatpush.msra.mxu0 0.0
  %648 = vmatpush.msra.mxu0 %v507
  %649 = vmatpush.msra.mxu0 %v504
  %650 = vmatmul.f32.gmra.mxu0 %v253
  %v651 = vpop.f32.mrf.mxu0
  %v652 = vadd.f32 0.0, %v651
  %653 = vmatmul.f32.gmra.mxu0 %v256
  %v654 = vpop.f32.mrf.mxu0
  %v655 = vadd.f32 0.0, %v654
  %656 = vmatmul.f32.gmra.mxu0 %v259
  %v657 = vpop.f32.mrf.mxu0
  %v658 = vadd.f32 0.0, %v657
  %659 = vmatmul.f32.gmra.mxu0 %v262
  %v660 = vpop.f32.mrf.mxu0
  %v661 = vadd.f32 0.0, %v660
  %662 = vmatmul.f32.gmra.mxu0 %v265
  %v663 = vpop.f32.mrf.mxu0
  %v664 = vadd.f32 0.0, %v663
  %665 = vmatmul.f32.gmra.mxu0 %v268
  %v666 = vpop.f32.mrf.mxu0
  %v667 = vadd.f32 0.0, %v666
  %668 = vmatmul.f32.gmra.mxu0 %v271
  %v669 = vpop.f32.mrf.mxu0
  %v670 = vadd.f32 0.0, %v669
  %671 = vmatmul.f32.gmra.mxu0 %v274
  %v672 = vpop.f32.mrf.mxu0
  %v673 = vadd.f32 0.0, %v672
  %674 = vmatmul.f32.gmra.mxu0 %v277
  %v675 = vpop.f32.mrf.mxu0
  %v676 = vadd.f32 0.0, %v675
  %677 = vmatmul.f32.gmra.mxu0 %v280
  %v678 = vpop.f32.mrf.mxu0
  %v679 = vadd.f32 0.0, %v678
  %680 = vmatmul.f32.gmra.mxu0 %v283
  %v681 = vpop.f32.mrf.mxu0
  %v682 = vadd.f32 0.0, %v681
  %683 = vmatmul.f32.gmra.mxu0 %v286
  %v684 = vpop.f32.mrf.mxu0
  %v685 = vadd.f32 0.0, %v684
  %686 = vmatmul.f32.gmra.mxu0 %v289
  %v687 = vpop.f32.mrf.mxu0
  %v688 = vadd.f32 0.0, %v687
  %689 = vmatmul.f32.gmra.mxu0 %v292
  %v690 = vpop.f32.mrf.mxu0
  %v691 = vadd.f32 0.0, %v690
  %692 = vmatmul.f32.gmra.mxu0 %v295
  %v693 = vpop.f32.mrf.mxu0
  %v694 = vadd.f32 0.0, %v693
  %695 = vmatmul.f32.gmra.mxu0 %v298
  %v696 = vpop.f32.mrf.mxu0
  %v697 = vadd.f32 0.0, %v696
  %698 = vdwg.mxu0
  %v699 = vmul.f32 %v87, %v652
  %v700 = vmul.f32 %v88, %v655
  %v701 = vmul.f32 %v89, %v658
  %v702 = vmul.f32 %v90, %v661
  %v703 = vmul.f32 %v91, %v664
  %v704 = vmul.f32 %v92, %v667
  %v705 = vmul.f32 %v93, %v670
  %v706 = vmul.f32 %v94, %v673
  %v707 = vmul.f32 %v95, %v676
  %v708 = vmul.f32 %v96, %v679
  %v709 = vmul.f32 %v97, %v682
  %v710 = vmul.f32 %v98, %v685
  %v711 = vmul.f32 %v99, %v688
  %v712 = vmul.f32 %v100, %v691
  %v713 = vmul.f32 %v101, %v694
  %v714 = vmul.f32 %v102, %v697
  %715 = vmatpush.msra.mxu0 %v714
  %716 = vmatpush.msra.mxu0 %v713
  %717 = vmatpush.msra.mxu0 %v712
  %718 = vmatpush.msra.mxu0 %v711
  %719 = vmatpush.msra.mxu0 %v710
  %720 = vmatpush.msra.mxu0 %v709
  %721 = vmatpush.msra.mxu0 %v708
  %722 = vmatpush.msra.mxu0 %v707
  %723 = vmatpush.msra.mxu0 %v706
  %724 = vmatpush.msra.mxu0 %v705
  %725 = vmatpush.msra.mxu0 %v704
  %726 = vmatpush.msra.mxu0 %v703
  %727 = vmatpush.msra.mxu0 %v702
  %728 = vmatpush.msra.mxu0 %v701
  %729 = vmatpush.msra.mxu0 %v700
  %730 = vmatpush.msra.mxu0 %v699
  %731 = vmatmul.f32.gmra.mxu0 %v631
  %v732 = vpop.f32.mrf.mxu0
  %v733 = vadd.f32 0.0, %v732
  %734 = vmatmul.f32.gmra.mxu0 %v633
  %v735 = vpop.f32.mrf.mxu0
  %v736 = vadd.f32 0.0, %v735
  %737 = vdwg.mxu0
  %738 = vmatpush.msra.mxu0 %v102
  %739 = vmatpush.msra.mxu0 %v101
  %740 = vmatpush.msra.mxu0 %v100
  %741 = vmatpush.msra.mxu0 %v99
  %742 = vmatpush.msra.mxu0 %v98
  %743 = vmatpush.msra.mxu0 %v97
  %744 = vmatpush.msra.mxu0 %v96
  %745 = vmatpush.msra.mxu0 %v95
  %746 = vmatpush.msra.mxu0 %v94
  %747 = vmatpush.msra.mxu0 %v93
  %748 = vmatpush.msra.mxu0 %v92
  %749 = vmatpush.msra.mxu0 %v91
  %750 = vmatpush.msra.mxu0 %v90
  %751 = vmatpush.msra.mxu0 %v89
  %752 = vmatpush.msra.mxu0 %v88
  %753 = vmatpush.msra.mxu0 %v87
  %754 = vmatmul.f32.gmra.mxu0 %v631
  %v755 = vpop.f32.mrf.mxu0
  %v756 = vadd.f32 0.0, %v755
  %757 = vmatmul.f32.gmra.mxu0 %v633
  %v758 = vpop.f32.mrf.mxu0
  %v759 = vadd.f32 0.0, %v758
  %760 = vdwg.mxu0
  %v761 = vrcp.pop %v756
  %v762 = vmul.f32 %v756, %v761
  %v763 = vsub.f32 1.0, %v762
  %v764 = vmul.f32 %v761, %v763
  %v765 = vadd.f32 %v761, %v764
  %vm766 = vweird.f32 %v756
  %vm767 = vweird.f32 %v761
  %vm768 = vmor %vm766, %vm767
  %v769 = vsel %vm768, %v761, %v765
  %v770 = vand.u32 2147483647, %v756
  %vm771 = vcmp.eq.f32.partialorder %v770, 8.507059e+37
  %v772 = vand.u32 %v756, 2147483648
  %v773 = vor.u32 1.1754944e-38, %v772
  %v774 = vsel %vm771, %v773, %v769
  %v775 = vmul.f32 %v733, %v774
  %v776 = vrcp.pop %v759
  %v777 = vmul.f32 %v759, %v776
  %v778 = vsub.f32 1.0, %v777
  %v779 = vmul.f32 %v776, %v778
  %v780 = vadd.f32 %v776, %v779
  %vm781 = vweird.f32 %v759
  %vm782 = vweird.f32 %v776
  %vm783 = vmor %vm781, %vm782
  %v784 = vsel %vm783, %v776, %v780
  %v785 = vand.u32 2147483647, %v759
  %vm786 = vcmp.eq.f32.partialorder %v785, 8.507059e+37
  %v787 = vand.u32 %v759, 2147483648
  %v788 = vor.u32 1.1754944e-38, %v787
  %v789 = vsel %vm786, %v788, %v784
  %v790 = vmul.f32 %v736, %v789
  %v792 = vperm.slane %v525, 0
  %v794 = vadd.f32 %v775, %v792
  %v795 = vadd.f32 %v790, %v792
  %vm796 = vcmp.gt.f32.partialorder %v794, 0.0
  %vm797 = vcmp.gt.f32.partialorder %v795, 0.0
  %v798 = vmul.f32 %v794, 1.442695
  %v799 = vpow.pop %v798
  %v800 = vmul.f32 %v795, 1.442695
  %v801 = vpow.pop %v800
  %v802 = vsub.f32 %v799, 1.0
  %v803 = vsub.f32 %v801, 1.0
  %v804 = vsel %vm796, %v794, %v802
  %v805 = vsel %vm797, %v795, %v803
  %v806 = vld [vmem:[%s14] sm:$0xff]
  %v807 = vld [vmem:[%s14 + $0x8] sm:$0xff]
  %v808 = vld [vmem:[%s14 + $0x10] sm:$0xff]
  %v809 = vld [vmem:[%s14 + $0x18] sm:$0xff]
  %v810 = vld [vmem:[%s14 + $0x20] sm:$0xff]
  %v811 = vld [vmem:[%s14 + $0x28] sm:$0xff]
  %v812 = vld [vmem:[%s14 + $0x30] sm:$0xff]
  %v813 = vld [vmem:[%s14 + $0x38] sm:$0xff]
  %v815 = vsel %vm139, %v804, 0
  %v818 = vsel %vm139, %v805, 0
  %820 = vmatpush.msra.mxu0 0.0
  %821 = vmatpush.msra.mxu0 0.0
  %822 = vmatpush.msra.mxu0 0.0
  %823 = vmatpush.msra.mxu0 0.0
  %824 = vmatpush.msra.mxu0 0.0
  %825 = vmatpush.msra.mxu0 0.0
  %826 = vmatpush.msra.mxu0 0.0
  %827 = vmatpush.msra.mxu0 0.0
  %828 = vmatpush.msra.mxu0 %v813
  %829 = vmatpush.msra.mxu0 %v812
  %830 = vmatpush.msra.mxu0 %v811
  %831 = vmatpush.msra.mxu0 %v810
  %832 = vmatpush.msra.mxu0 %v809
  %833 = vmatpush.msra.mxu0 %v808
  %834 = vmatpush.msra.mxu0 %v807
  %835 = vmatpush.msra.mxu0 %v806
  %836 = vmatmul.f32.gmra.mxu0 %v815
  %v837 = vpop.f32.mrf.mxu0
  %v838 = vadd.f32 0.0, %v837
  %839 = vmatmul.f32.gmra.mxu0 %v818
  %v840 = vpop.f32.mrf.mxu0
  %v841 = vadd.f32 0.0, %v840
  %842 = vdwg.mxu0
  %v843 = vld [vmem:[%s15] sm:$0xff]
  %v844 = vld [vmem:[%s15 + $0x8] sm:$0xff]
  %v845 = vld [vmem:[%s15 + $0x10] sm:$0xff]
  %v846 = vld [vmem:[%s15 + $0x18] sm:$0xff]
  %v847 = vld [vmem:[%s15 + $0x20] sm:$0xff]
  %v848 = vld [vmem:[%s15 + $0x28] sm:$0xff]
  %v849 = vld [vmem:[%s15 + $0x30] sm:$0xff]
  %v850 = vld [vmem:[%s15 + $0x38] sm:$0xff]
  %v851 = vld [vmem:[%s16] sm:$0xff]
  %v852 = vld [vmem:[%s16 + $0x8] sm:$0xff]
  %v853 = vld [vmem:[%s16 + $0x10] sm:$0xff]
  %v854 = vld [vmem:[%s16 + $0x18] sm:$0xff]
  %v855 = vld [vmem:[%s16 + $0x20] sm:$0xff]
  %v856 = vld [vmem:[%s16 + $0x28] sm:$0xff]
  %v857 = vld [vmem:[%s16 + $0x30] sm:$0xff]
  %v858 = vld [vmem:[%s16 + $0x38] sm:$0xff]
  %v859 = vld [vmem:[%s17] sm:$0x1]
  %v861 = vsel %vm139, %v838, 0
  %v864 = vsel %vm139, %v841, 0
  %866 = vmatpush.msra.mxu0 0.0
  %867 = vmatpush.msra.mxu0 0.0
  %868 = vmatpush.msra.mxu0 0.0
  %869 = vmatpush.msra.mxu0 0.0
  %870 = vmatpush.msra.mxu0 0.0
  %871 = vmatpush.msra.mxu0 0.0
  %872 = vmatpush.msra.mxu0 0.0
  %873 = vmatpush.msra.mxu0 0.0
  %874 = vmatpush.msra.mxu0 %v858
  %875 = vmatpush.msra.mxu0 %v857
  %876 = vmatpush.msra.mxu0 %v856
  %877 = vmatpush.msra.mxu0 %v855
  %878 = vmatpush.msra.mxu0 %v854
  %879 = vmatpush.msra.mxu0 %v853
  %880 = vmatpush.msra.mxu0 %v852
  %881 = vmatpush.msra.mxu0 %v851
  %882 = vmatmul.f32.gmra.mxu0 %v861
  %v883 = vpop.f32.mrf.mxu0
  %v884 = vadd.f32 0.0, %v883
  %885 = vmatmul.f32.gmra.mxu0 %v864
  %v886 = vpop.f32.mrf.mxu0
  %v887 = vadd.f32 0.0, %v886
  %888 = vdwg.mxu0
  %v890 = vsel %vm169, %v884, 0
  %v893 = vsel %vm169, %v887, 0
  %895 = vmatpush.msra.mxu0 0.0
  %896 = vmatpush.msra.mxu0 0.0
  %897 = vmatpush.msra.mxu0 0.0
  %898 = vmatpush.msra.mxu0 0.0
  %899 = vmatpush.msra.mxu0 0.0
  %900 = vmatpush.msra.mxu0 0.0
  %901 = vmatpush.msra.mxu0 0.0
  %902 = vmatpush.msra.mxu0 0.0
  %903 = vmatpush.msra.mxu0 0.0
  %904 = vmatpush.msra.mxu0 0.0
  %905 = vmatpush.msra.mxu0 0.0
  %906 = vmatpush.msra.mxu0 0.0
  %907 = vmatpush.msra.mxu0 0.0
  %908 = vmatpush.msra.mxu0 0.0
  %909 = vmatpush.msra.mxu0 0.0
  %910 = vmatpush.msra.mxu0 %v103
  %911 = vmatmul.f32.gmra.mxu0 %v890
  %v912 = vpop.f32.mrf.mxu0
  %v913 = vadd.f32 0.0, %v912
  %914 = vmatmul.f32.gmra.mxu0 %v893
  %v915 = vpop.f32.mrf.mxu0
  %v916 = vadd.f32 0.0, %v915
  %917 = vdwg.mxu0
  %v918 = vmul.f32 %v85, %v913
  %v919 = vmul.f32 %v86, %v916
  %v920 = vadd.f32 %v918, %v919
  %v921 = vrot.slane %v920, 4
  %v922 = vadd.f32 %v920, %v921
  %v923 = vrot.slane %v922, 2
  %v924 = vadd.f32 %v922, %v923
  %v925 = vrot.slane %v924, 1
  %v926 = vadd.f32 %v924, %v925
  %927 = vmatpush.msra.mxu0 0.0
  %928 = vmatpush.msra.mxu0 0.0
  %929 = vmatpush.msra.mxu0 0.0
  %930 = vmatpush.msra.mxu0 0.0
  %931 = vmatpush.msra.mxu0 0.0
  %932 = vmatpush.msra.mxu0 0.0
  %933 = vmatpush.msra.mxu0 0.0
  %934 = vmatpush.msra.mxu0 0.0
  %935 = vmatpush.msra.mxu0 %v850
  %936 = vmatpush.msra.mxu0 %v849
  %937 = vmatpush.msra.mxu0 %v848
  %938 = vmatpush.msra.mxu0 %v847
  %939 = vmatpush.msra.mxu0 %v846
  %940 = vmatpush.msra.mxu0 %v845
  %941 = vmatpush.msra.mxu0 %v844
  %942 = vmatpush.msra.mxu0 %v843
  %943 = vmatmul.f32.gmra.mxu0 %v861
  %v944 = vpop.f32.mrf.mxu0
  %v945 = vadd.f32 %v926, %v944
  %946 = vmatmul.f32.gmra.mxu0 %v864
  %v947 = vpop.f32.mrf.mxu0
  %v948 = vadd.f32 %v926, %v947
  %949 = vdwg.mxu0
  %vm950 = vcmp.gt.f32.partialorder %v945, 0.0
  %vm951 = vcmp.gt.f32.partialorder %v948, 0.0
  %v952 = vmul.f32 %v945, 0.2
  %v953 = vmul.f32 %v948, 0.2
  %v954 = vsel %vm950, %v945, %v952
  %v955 = vsel %vm951, %v948, %v953
  %v956 = vsel %vm237, %v954, -1e+30
  %v957 = vsel %vm238, %v955, -1e+30
  %958 = vmax.xlane.f32.xlu0 %v956
  %v959 = vpop.xlane.xlu0 %958
  %960 = vmax.xlane.f32.xlu0 %v957
  %v961 = vpop.xlane.xlu0 %960
  %v962 = vsub.f32 %v956, %v959
  %v963 = vsub.f32 %v957, %v961
  %v964 = vmul.f32 %v962, 1.442695
  %v965 = vpow.pop %v964
  %v966 = vmul.f32 %v963, 1.442695
  %v967 = vpow.pop %v966
  %968 = vmatpush.msra.mxu0 0.0
  %969 = vmatpush.msra.mxu0 0.0
  %970 = vmatpush.msra.mxu0 0.0
  %971 = vmatpush.msra.mxu0 0.0
  %972 = vmatpush.msra.mxu0 0.0
  %973 = vmatpush.msra.mxu0 0.0
  %974 = vmatpush.msra.mxu0 0.0
  %975 = vmatpush.msra.mxu0 0.0
  %976 = vmatpush.msra.mxu0 0.0
  %977 = vmatpush.msra.mxu0 0.0
  %978 = vmatpush.msra.mxu0 0.0
  %979 = vmatpush.msra.mxu0 0.0
  %980 = vmatpush.msra.mxu0 0.0
  %981 = vmatpush.msra.mxu0 0.0
  %982 = vmatpush.msra.mxu0 %v841
  %983 = vmatpush.msra.mxu0 %v838
  %984 = vmatmul.f32.gmra.mxu0 %v253
  %v985 = vpop.f32.mrf.mxu0
  %v986 = vadd.f32 0.0, %v985
  %987 = vmatmul.f32.gmra.mxu0 %v256
  %v988 = vpop.f32.mrf.mxu0
  %v989 = vadd.f32 0.0, %v988
  %990 = vmatmul.f32.gmra.mxu0 %v259
  %v991 = vpop.f32.mrf.mxu0
  %v992 = vadd.f32 0.0, %v991
  %993 = vmatmul.f32.gmra.mxu0 %v262
  %v994 = vpop.f32.mrf.mxu0
  %v995 = vadd.f32 0.0, %v994
  %996 = vmatmul.f32.gmra.mxu0 %v265
  %v997 = vpop.f32.mrf.mxu0
  %v998 = vadd.f32 0.0, %v997
  %999 = vmatmul.f32.gmra.mxu0 %v268
  %v1000 = vpop.f32.mrf.mxu0
  %v1001 = vadd.f32 0.0, %v1000
  %1002 = vmatmul.f32.gmra.mxu0 %v271
  %v1003 = vpop.f32.mrf.mxu0
  %v1004 = vadd.f32 0.0, %v1003
  %1005 = vmatmul.f32.gmra.mxu0 %v274
  %v1006 = vpop.f32.mrf.mxu0
  %v1007 = vadd.f32 0.0, %v1006
  %1008 = vmatmul.f32.gmra.mxu0 %v277
  %v1009 = vpop.f32.mrf.mxu0
  %v1010 = vadd.f32 0.0, %v1009
  %1011 = vmatmul.f32.gmra.mxu0 %v280
  %v1012 = vpop.f32.mrf.mxu0
  %v1013 = vadd.f32 0.0, %v1012
  %1014 = vmatmul.f32.gmra.mxu0 %v283
  %v1015 = vpop.f32.mrf.mxu0
  %v1016 = vadd.f32 0.0, %v1015
  %1017 = vmatmul.f32.gmra.mxu0 %v286
  %v1018 = vpop.f32.mrf.mxu0
  %v1019 = vadd.f32 0.0, %v1018
  %1020 = vmatmul.f32.gmra.mxu0 %v289
  %v1021 = vpop.f32.mrf.mxu0
  %v1022 = vadd.f32 0.0, %v1021
  %1023 = vmatmul.f32.gmra.mxu0 %v292
  %v1024 = vpop.f32.mrf.mxu0
  %v1025 = vadd.f32 0.0, %v1024
  %1026 = vmatmul.f32.gmra.mxu0 %v295
  %v1027 = vpop.f32.mrf.mxu0
  %v1028 = vadd.f32 0.0, %v1027
  %1029 = vmatmul.f32.gmra.mxu0 %v298
  %v1030 = vpop.f32.mrf.mxu0
  %v1031 = vadd.f32 0.0, %v1030
  %1032 = vdwg.mxu0
  %v1033 = vmul.f32 %v87, %v986
  %v1034 = vmul.f32 %v88, %v989
  %v1035 = vmul.f32 %v89, %v992
  %v1036 = vmul.f32 %v90, %v995
  %v1037 = vmul.f32 %v91, %v998
  %v1038 = vmul.f32 %v92, %v1001
  %v1039 = vmul.f32 %v93, %v1004
  %v1040 = vmul.f32 %v94, %v1007
  %v1041 = vmul.f32 %v95, %v1010
  %v1042 = vmul.f32 %v96, %v1013
  %v1043 = vmul.f32 %v97, %v1016
  %v1044 = vmul.f32 %v98, %v1019
  %v1045 = vmul.f32 %v99, %v1022
  %v1046 = vmul.f32 %v100, %v1025
  %v1047 = vmul.f32 %v101, %v1028
  %v1048 = vmul.f32 %v102, %v1031
  %1049 = vmatpush.msra.mxu0 %v1048
  %1050 = vmatpush.msra.mxu0 %v1047
  %1051 = vmatpush.msra.mxu0 %v1046
  %1052 = vmatpush.msra.mxu0 %v1045
  %1053 = vmatpush.msra.mxu0 %v1044
  %1054 = vmatpush.msra.mxu0 %v1043
  %1055 = vmatpush.msra.mxu0 %v1042
  %1056 = vmatpush.msra.mxu0 %v1041
  %1057 = vmatpush.msra.mxu0 %v1040
  %1058 = vmatpush.msra.mxu0 %v1039
  %1059 = vmatpush.msra.mxu0 %v1038
  %1060 = vmatpush.msra.mxu0 %v1037
  %1061 = vmatpush.msra.mxu0 %v1036
  %1062 = vmatpush.msra.mxu0 %v1035
  %1063 = vmatpush.msra.mxu0 %v1034
  %1064 = vmatpush.msra.mxu0 %v1033
  %1065 = vmatmul.f32.gmra.mxu0 %v965
  %v1066 = vpop.f32.mrf.mxu0
  %v1067 = vadd.f32 0.0, %v1066
  %1068 = vmatmul.f32.gmra.mxu0 %v967
  %v1069 = vpop.f32.mrf.mxu0
  %v1070 = vadd.f32 0.0, %v1069
  %1071 = vdwg.mxu0
  %1072 = vmatpush.msra.mxu0 %v102
  %1073 = vmatpush.msra.mxu0 %v101
  %1074 = vmatpush.msra.mxu0 %v100
  %1075 = vmatpush.msra.mxu0 %v99
  %1076 = vmatpush.msra.mxu0 %v98
  %1077 = vmatpush.msra.mxu0 %v97
  %1078 = vmatpush.msra.mxu0 %v96
  %1079 = vmatpush.msra.mxu0 %v95
  %1080 = vmatpush.msra.mxu0 %v94
  %1081 = vmatpush.msra.mxu0 %v93
  %1082 = vmatpush.msra.mxu0 %v92
  %1083 = vmatpush.msra.mxu0 %v91
  %1084 = vmatpush.msra.mxu0 %v90
  %1085 = vmatpush.msra.mxu0 %v89
  %1086 = vmatpush.msra.mxu0 %v88
  %1087 = vmatpush.msra.mxu0 %v87
  %1088 = vmatmul.f32.gmra.mxu0 %v965
  %v1089 = vpop.f32.mrf.mxu0
  %v1090 = vadd.f32 0.0, %v1089
  %1091 = vmatmul.f32.gmra.mxu0 %v967
  %v1092 = vpop.f32.mrf.mxu0
  %v1093 = vadd.f32 0.0, %v1092
  %1094 = vdwg.mxu0
  %v1095 = vrcp.pop %v1090
  %v1096 = vmul.f32 %v1090, %v1095
  %v1097 = vsub.f32 1.0, %v1096
  %v1098 = vmul.f32 %v1095, %v1097
  %v1099 = vadd.f32 %v1095, %v1098
  %vm1100 = vweird.f32 %v1090
  %vm1101 = vweird.f32 %v1095
  %vm1102 = vmor %vm1100, %vm1101
  %v1103 = vsel %vm1102, %v1095, %v1099
  %v1104 = vand.u32 2147483647, %v1090
  %vm1105 = vcmp.eq.f32.partialorder %v1104, 8.507059e+37
  %v1106 = vand.u32 %v1090, 2147483648
  %v1107 = vor.u32 1.1754944e-38, %v1106
  %v1108 = vsel %vm1105, %v1107, %v1103
  %v1109 = vmul.f32 %v1067, %v1108
  %v1110 = vrcp.pop %v1093
  %v1111 = vmul.f32 %v1093, %v1110
  %v1112 = vsub.f32 1.0, %v1111
  %v1113 = vmul.f32 %v1110, %v1112
  %v1114 = vadd.f32 %v1110, %v1113
  %vm1115 = vweird.f32 %v1093
  %vm1116 = vweird.f32 %v1110
  %vm1117 = vmor %vm1115, %vm1116
  %v1118 = vsel %vm1117, %v1110, %v1114
  %v1119 = vand.u32 2147483647, %v1093
  %vm1120 = vcmp.eq.f32.partialorder %v1119, 8.507059e+37
  %v1121 = vand.u32 %v1093, 2147483648
  %v1122 = vor.u32 1.1754944e-38, %v1121
  %v1123 = vsel %vm1120, %v1122, %v1118
  %v1124 = vmul.f32 %v1070, %v1123
  %v1126 = vperm.slane %v859, 0
  %v1128 = vadd.f32 %v1109, %v1126
  %v1129 = vadd.f32 %v1124, %v1126
  %vm1130 = vcmp.gt.f32.partialorder %v1128, 0.0
  %vm1131 = vcmp.gt.f32.partialorder %v1129, 0.0
  %v1132 = vmul.f32 %v1128, 1.442695
  %v1133 = vpow.pop %v1132
  %v1134 = vmul.f32 %v1129, 1.442695
  %v1135 = vpow.pop %v1134
  %v1136 = vsub.f32 %v1133, 1.0
  %v1137 = vsub.f32 %v1135, 1.0
  %v1138 = vsel %vm1130, %v1128, %v1136
  %v1139 = vsel %vm1131, %v1129, %v1137
  %v1140 = vld [vmem:[%s18] sm:$0xff]
  %v1141 = vld [vmem:[%s18 + $0x8] sm:$0xff]
  %v1142 = vld [vmem:[%s18 + $0x10] sm:$0xff]
  %v1143 = vld [vmem:[%s18 + $0x18] sm:$0xff]
  %v1144 = vld [vmem:[%s18 + $0x20] sm:$0xff]
  %v1145 = vld [vmem:[%s18 + $0x28] sm:$0xff]
  %v1146 = vld [vmem:[%s18 + $0x30] sm:$0xff]
  %v1147 = vld [vmem:[%s18 + $0x38] sm:$0xff]
  %v1148 = vld [vmem:[#allocation2] sm:$0x1]
  %v1150 = vperm.slane %v1148, 0
  %v1153 = vsel %vm139, %v1138, 0
  %v1156 = vsel %vm139, %v1139, 0
  %1158 = vmatpush.msra.mxu0 0.0
  %1159 = vmatpush.msra.mxu0 0.0
  %1160 = vmatpush.msra.mxu0 0.0
  %1161 = vmatpush.msra.mxu0 0.0
  %1162 = vmatpush.msra.mxu0 0.0
  %1163 = vmatpush.msra.mxu0 0.0
  %1164 = vmatpush.msra.mxu0 0.0
  %1165 = vmatpush.msra.mxu0 0.0
  %1166 = vmatpush.msra.mxu0 %v1147
  %1167 = vmatpush.msra.mxu0 %v1146
  %1168 = vmatpush.msra.mxu0 %v1145
  %1169 = vmatpush.msra.mxu0 %v1144
  %1170 = vmatpush.msra.mxu0 %v1143
  %1171 = vmatpush.msra.mxu0 %v1142
  %1172 = vmatpush.msra.mxu0 %v1141
  %1173 = vmatpush.msra.mxu0 %v1140
  %1174 = vmatmul.f32.gmra.mxu0 %v1153
  %v1175 = vpop.f32.mrf.mxu0
  %v1176 = vadd.f32 %v1150, %v1175
  %1177 = vmatmul.f32.gmra.mxu0 %v1156
  %v1178 = vpop.f32.mrf.mxu0
  %v1179 = vadd.f32 %v1150, %v1178
  %1180 = vdwg.mxu0
  %vm1181 = vcmask 7168
  %1182 = vst.msk [vmem:[%s20] sm:$0xff] %vm1181, %v1176
  %1183 = vst.msk [vmem:[%s20 + $0x8] sm:$0xff] %vm1181, %v1179
  // Predicated region
  $region82: #{gatnet_forward.1} parent=0 // pred_check
    _
  $region83: #{gatnet_forward.1} parent=0 // pred_check_branch
    %1185 = sbr.rel (0) target = $region85
  $region84: #{gatnet_forward.1} parent=0 // pred_region
    _
  $region85: #{gatnet_forward.1} parent=0 // pred_fallthru
    _
  // Predicated region
  $region86: #{gatnet_forward.1} parent=0 // pred_check
    _
  $region87: #{gatnet_forward.1} parent=0 // pred_check_branch
    %1187 = sbr.rel (0) target = $region89
  $region88: #{gatnet_forward.1} parent=0 // pred_region
    _
  $region89: #{gatnet_forward.1} parent=0 // pred_fallthru
    _

</llo_original>
